<compile_context>
chip_gen: v6e
topology: v6e:2x2x1
jax: 0.10.0
libtpu: 0.0.40
codegen_flags: <defaults>
</compile_context>

<pallas_src>
import math
import functools

import jax
import jax.numpy as jnp
import numpy as np
from jax import lax
from jax.experimental import pallas as pl
from jax.experimental.pallas import tpu as pltpu


def graph_attention_kernel(x_ref, r_ref, bias_ref,
                           wq_ref, bq_ref, wk_ref, bk_ref,
                           wvw_ref, bvw_ref, bo_ref,
                           out_ref,
                           q_scr, k_scr, vw_scr, acc_ref,
                           *, heads_per_block, head_dim, dot_dtype):
    # Grid = (batch, head_group).  Per step:
    #   x_ref:    (1, N, D)       batch element (resident across head groups)
    #   r_ref:    (1, 3, N, N)    resident across head groups
    #   bias_ref: (1, hpb, N, N)  this head-group's attention bias
    #   wq_ref:   (D, D)  full Q weight (pre-scaled by 1/sqrt(hd));  x @ wq == q
    #   bq_ref:   (1, D)  pre-scaled Q bias
    #   wk_ref:   (D, D)  full K weight
    #   bk_ref:   (1, D)
    #   wvw_ref:  (D, H)  V weight folded with o_proj weight (one column / head)
    #   bvw_ref:  (1, H)  V bias folded with o_proj weight
    #   bo_ref:   (1,)    o_proj bias (SMEM scalar)
    #   out_ref:  (1, 3, N)  lane-dense output, resident across head groups
    # Scratch (persists across the head-group axis, refreshed at g == 0):
    #   q_scr:   (D, N) f32   q^T   (per-head slice = sublane slice)
    #   k_scr:   (D, N) f32   k^T
    #   vw_scr:  (H, N) f32   per-head row vectors (v_h @ wo_h)^T
    #   acc_ref: (3, N) f32   force accumulator
    g = pl.program_id(1)

    @pl.when(g == 0)
    def _init():
        x = x_ref[0]                                              # (N, D)

        def project_t(w_ref, b_ref):
            # Lane-dense (N,D)@(D,Dout) done once per batch; store transposed.
            y = jnp.dot(x, w_ref[...],
                        preferred_element_type=jnp.float32) + b_ref[...]
            return y.T                                            # (Dout, N)

        q_scr[...] = project_t(wq_ref, bq_ref)                    # (D, N)
        k_scr[...] = project_t(wk_ref, bk_ref)                    # (D, N)
        vw_scr[...] = project_t(wvw_ref, bvw_ref)                 # (H, N)
        acc_ref[...] = jnp.zeros_like(acc_ref)

    r = r_ref[0]                                                  # (3, N, N)

    def head_body(j, carry):
        h = g * heads_per_block + j                               # global head id
        start = pl.multiple_of(h * head_dim, head_dim)
        qh_t = q_scr[pl.ds(start, head_dim), :].astype(dot_dtype)  # (hd, N)
        kh_t = k_scr[pl.ds(start, head_dim), :].astype(dot_dtype)  # (hd, N)

        # logits[i, j] = sum_d q[i, d] * k[j, d]   (scale folded into wq/bq)
        logits = lax.dot_general(qh_t, kh_t, (((0,), (0,)), ((), ())),
                                 preferred_element_type=jnp.float32)
        logits = logits + bias_ref[0, j]                          # (N, N)
        # TODO(synk): optional `mask` argument (masked_fill with -1e9) of the
        # PyTorch module is not wired in; mask=None (the default) is implemented.

        m = jnp.max(logits, axis=-1, keepdims=True)
        e = jnp.exp(logits - m)
        w = e / jnp.sum(e, axis=-1, keepdims=True)                # exact softmax

        # (r[c] * w) @ vw_h  as a lane-dense VPU multiply + cross-lane reduce.
        u = w * vw_scr[pl.ds(h, 1), :]                            # (N,N) * (1,N)
        acc_ref[...] += jnp.sum(r * u[None, :, :], axis=-1)       # (3, N)
        return carry

    lax.fori_loop(0, heads_per_block, head_body, 0, unroll=True)

    @pl.when(g == pl.num_programs(1) - 1)
    def _finalize():
        out_ref[0] = (acc_ref[...] + bo_ref[0]).astype(out_ref.dtype)


def _vmem_bytes(n_nodes, d_model, n_head, heads_per_block):
    """Estimated VMEM footprint (double-buffered blocks + scratch + slack)."""
    f32 = 4
    dbuf = 2  # BlockSpec double buffering
    blocks = dbuf * f32 * (
        n_nodes * d_model                        # x
        + 3 * n_nodes * n_nodes                  # r
        + heads_per_block * n_nodes * n_nodes    # bias head-group block
        + 2 * d_model * d_model                  # wq, wk
        + 2 * d_model                            # bq, bk
        + d_model * n_head + n_head              # wvw, bvw
        + 3 * n_nodes)                           # out block
    scratch = f32 * (2 * d_model * n_nodes + n_head * n_nodes + 8 * n_nodes)
    return blocks + scratch + (2 << 20)          # slack for Mosaic internals


def graph_attention(x, r, bias, params, n_head, *, use_bf16_matmul=True):
    """Pallas wrapper. Returns force with shape (bs, N, 3, 1)."""
    bs, n_nodes, d_model = x.shape
    head_dim = d_model // n_head
    wq, bq, wk, bk, wv, bv, wo, bo = params
    scale = 1.0 / math.sqrt(head_dim)

    # torch Linear computes x @ W.T; fold the 1/sqrt(hd) scale into Q.
    wq_in = (wq.T * scale).astype(jnp.float32)                 # (D, D)
    bq_in = (bq * scale).reshape(1, d_model)
    wk_in = wk.T.astype(jnp.float32)                           # (D, D)
    bk_in = bk.reshape(1, d_model)

    # Fold o_proj (Linear(D, 1)) into V:  (A @ v_h) @ wo_h == A @ (v_h @ wo_h).
    wv_t = wv.T.reshape(d_model, n_head, head_dim)             # (D, H, hd)
    wo_h = wo.reshape(n_head, head_dim)                        # (H, hd)
    wvw = jnp.einsum('dhk,hk->dh', wv_t, wo_h)                 # (D, H)
    bvw = jnp.einsum('hk,hk->h',
                     bv.reshape(n_head, head_dim), wo_h).reshape(1, n_head)
    bo_in = bo.reshape(1).astype(jnp.float32)                  # SMEM scalar

    # Per-generation VMEM capacity -> head-group size + scoped limit (leave
    # headroom: never set the limit to the full physical capacity).
    try:
        phys_vmem = int(pltpu.get_tpu_info().vmem_capacity_bytes)
    except Exception:
        phys_vmem = 128 << 20
    vmem_cap = int(phys_vmem * 0.85)

    heads_per_block = 1
    for cand in range(1, n_head + 1):
        if n_head % cand == 0 and \
                _vmem_bytes(n_nodes, d_model, n_head, cand) <= vmem_cap:
            heads_per_block = cand
    n_groups = n_head // heads_per_block
    vmem_limit = int(min(max(_vmem_bytes(n_nodes, d_model, n_head,
                                         heads_per_block), 32 << 20), vmem_cap))
    # TODO(synk): for very large N on v7x (64 MiB VMEM) a query-row tile grid
    # axis would bound the resident (1,3,N,N) r block; not implemented here.

    kern = functools.partial(
        graph_attention_kernel,
        heads_per_block=heads_per_block, head_dim=head_dim,
        dot_dtype=jnp.bfloat16 if use_bf16_matmul else jnp.float32)

    out = pl.pallas_call(
        kern,
        out_shape=jax.ShapeDtypeStruct((bs, 3, n_nodes), jnp.float32),
        grid_spec=pltpu.PrefetchScalarGridSpec(
            num_scalar_prefetch=0,
            grid=(bs, n_groups),
            in_specs=[
                pl.BlockSpec((1, n_nodes, d_model), lambda b, g: (b, 0, 0)),
                pl.BlockSpec((1, 3, n_nodes, n_nodes), lambda b, g: (b, 0, 0, 0)),
                pl.BlockSpec((1, heads_per_block, n_nodes, n_nodes),
                             lambda b, g: (b, g, 0, 0)),
                pl.BlockSpec((d_model, d_model), lambda b, g: (0, 0)),   # Wq (scaled)
                pl.BlockSpec((1, d_model), lambda b, g: (0, 0)),         # bq (scaled)
                pl.BlockSpec((d_model, d_model), lambda b, g: (0, 0)),   # Wk
                pl.BlockSpec((1, d_model), lambda b, g: (0, 0)),         # bk
                pl.BlockSpec((d_model, n_head), lambda b, g: (0, 0)),    # Wv @ wo
                pl.BlockSpec((1, n_head), lambda b, g: (0, 0)),          # bv @ wo
                pl.BlockSpec(memory_space=pltpu.MemorySpace.SMEM),       # bo
            ],
            out_specs=pl.BlockSpec((1, 3, n_nodes), lambda b, g: (b, 0, 0)),
            scratch_shapes=[
                pltpu.VMEM((d_model, n_nodes), jnp.float32),   # q^T
                pltpu.VMEM((d_model, n_nodes), jnp.float32),   # k^T
                pltpu.VMEM((n_head, n_nodes), jnp.float32),    # (v @ wo)^T
                pltpu.VMEM((3, n_nodes), jnp.float32),         # force accumulator
            ],
        ),
        compiler_params=pltpu.CompilerParams(
            dimension_semantics=("parallel", "arbitrary"),
            vmem_limit_bytes=vmem_limit),
    )(x, r, bias, wq_in, bq_in, wk_in, bk_in, wvw, bvw, bo_in)

    # (bs, 3, N) -> (bs, N, 3, 1)
    return jnp.swapaxes(out, 1, 2)[..., None]


def graph_attention_reference(x, r, bias, params, n_head):
    """Pure-JAX mirror of the PyTorch forward for verification."""
    wq, bq, wk, bk, wv, bv, wo, bo = params
    bs, n_nodes, d_model = x.shape
    hd = d_model // n_head
    q = (x @ wq.T + bq).reshape(bs, n_nodes, n_head, hd).transpose(0, 2, 1, 3)
    k = (x @ wk.T + bk).reshape(bs, n_nodes, n_head, hd).transpose(0, 2, 1, 3)
    v = (x @ wv.T + bv).reshape(bs, n_nodes, n_head, hd).transpose(0, 2, 1, 3)
    logits = jnp.matmul(q, jnp.swapaxes(k, -2, -1)) / math.sqrt(hd) + bias
    w = jax.nn.softmax(logits, axis=-1)                        # (bs,H,N,N)
    atten_3d = r[:, None] * jnp.transpose(w[..., None], (0, 1, 4, 2, 3))
    o = jnp.matmul(atten_3d, v[:, :, None])                    # (bs,H,3,N,hd)
    o = jnp.transpose(o, (0, 3, 2, 1, 4)).reshape(bs, n_nodes, 3, d_model)
    return o @ wo.T + bo                                       # (bs,N,3,1)


if __name__ == "__main__":
    bs, n_nodes, d_model, n_head = 2, 8, 32, 4

    key = jax.random.PRNGKey(0)
    keys = jax.random.split(key, 12)

    x = jax.random.normal(keys[0], (bs, n_nodes, d_model), jnp.float32)
    r = jax.random.normal(keys[1], (bs, 3, n_nodes, n_nodes), jnp.float32)
    bias = jax.random.normal(keys[2], (bs, n_head, n_nodes, n_nodes), jnp.float32)

    def lin_init(kw, kb, out_f, in_f):
        bound = 1.0 / math.sqrt(in_f)
        w = jax.random.uniform(kw, (out_f, in_f), jnp.float32, -bound, bound)
        b = jax.random.uniform(kb, (out_f,), jnp.float32, -bound, bound)
        return w, b

    wq, bq = lin_init(keys[3], keys[4], d_model, d_model)
    wk, bk = lin_init(keys[5], keys[6], d_model, d_model)
    wv, bv = lin_init(keys[7], keys[8], d_model, d_model)
    wo, bo = lin_init(keys[9], keys[10], 1, d_model)
    params = (wq, bq, wk, bk, wv, bv, wo, bo)

    force = graph_attention(x, r, bias, params, n_head)
    force = jax.block_until_ready(force)

    ref = graph_attention_reference(x, r, bias, params, n_head)
    assert force.shape == (bs, n_nodes, 3, 1), force.shape
    # Tolerance absorbs bf16 rounding on the QK^T logits (softmax itself is
    # computed with an exact divide in f32).
    np.testing.assert_allclose(np.asarray(force), np.asarray(ref),
                               rtol=1e-2, atol=1e-2)
    print("KERNEL_OK")
</pallas_src>

<mosaic_0001>
module attributes {stable_mosaic.version = 11 : i64} {
  func.func @graph_attention_kernel(%arg0: i32, %arg1: i32, %arg2: memref<1x8x32xf32, #tpu.memory_space<vmem>>, %arg3: memref<1x3x8x8xf32, #tpu.memory_space<vmem>>, %arg4: memref<1x4x8x8xf32, #tpu.memory_space<vmem>>, %arg5: memref<32x32xf32, #tpu.memory_space<vmem>>, %arg6: memref<1x32xf32, #tpu.memory_space<vmem>>, %arg7: memref<32x32xf32, #tpu.memory_space<vmem>>, %arg8: memref<1x32xf32, #tpu.memory_space<vmem>>, %arg9: memref<32x4xf32, #tpu.memory_space<vmem>>, %arg10: memref<1x4xf32, #tpu.memory_space<vmem>>, %arg11: memref<1xf32, #tpu.memory_space<smem>>, %arg12: memref<1x3x8xf32, #tpu.memory_space<vmem>>, %arg13: memref<32x8xf32, #tpu.memory_space<vmem>>, %arg14: memref<32x8xf32, #tpu.memory_space<vmem>>, %arg15: memref<4x8xf32, #tpu.memory_space<vmem>>, %arg16: memref<3x8xf32, #tpu.memory_space<vmem>>) attributes {dimension_semantics = [#tpu.dimension_semantics<parallel>, #tpu.dimension_semantics<arbitrary>], iteration_bounds = array<i64: 2, 1>, scalar_prefetch = 0 : i64, scratch_operands = 4 : i64, tpu.core_type = #tpu.core_type<tc>, window_params = [{transform_indices = @transform_0, window_bounds = array<i64: 1, 8, 32>}, {transform_indices = @transform_1, window_bounds = array<i64: 1, 3, 8, 8>}, {transform_indices = @transform_2, window_bounds = array<i64: 1, 4, 8, 8>}, {pipeline_mode = #tpu.pipeline_mode<synchronous>, transform_indices = @transform_3, window_bounds = array<i64: 32, 32>}, {pipeline_mode = #tpu.pipeline_mode<synchronous>, transform_indices = @transform_4, window_bounds = array<i64: 1, 32>}, {pipeline_mode = #tpu.pipeline_mode<synchronous>, transform_indices = @transform_5, window_bounds = array<i64: 32, 32>}, {pipeline_mode = #tpu.pipeline_mode<synchronous>, transform_indices = @transform_6, window_bounds = array<i64: 1, 32>}, {pipeline_mode = #tpu.pipeline_mode<synchronous>, transform_indices = @transform_7, window_bounds = array<i64: 32, 4>}, {pipeline_mode = #tpu.pipeline_mode<synchronous>, transform_indices = @transform_8, window_bounds = array<i64: 1, 4>}, {transform_indices = @transform_9, window_bounds = array<i64: 1>}, {transform_indices = @transform_10, window_bounds = array<i64: 1, 3, 8>}]} {
    %c0_i32 = arith.constant 0 : i32
    %0 = arith.cmpi eq, %arg1, %c0_i32 : i32
    %1 = arith.extui %0 : i1 to i32
    %c0_i32_0 = arith.constant 0 : i32
    %2 = arith.cmpi ne, %1, %c0_i32_0 : i32
    scf.if %2 {
      %c0_69 = arith.constant 0 : index
      %c0_70 = arith.constant 0 : index
      %c0_71 = arith.constant 0 : index
      %148 = vector.load %arg2[%c0_69, %c0_70, %c0_71] : memref<1x8x32xf32, #tpu.memory_space<vmem>>, vector<1x8x32xf32>
      %149 = vector.shape_cast %148 : vector<1x8x32xf32> to vector<8x32xf32>
      %c0_72 = arith.constant 0 : index
      %c0_73 = arith.constant 0 : index
      %150 = vector.load %arg5[%c0_72, %c0_73] : memref<32x32xf32, #tpu.memory_space<vmem>>, vector<32x32xf32>
      %cst_74 = arith.constant dense<0.000000e+00> : vector<8x32xf32>
      %151 = tpu.matmul %149, %150, %cst_74 {dimension_numbers = #tpu.dot_dimension_numbers<[1], [0], [0], [1], [0, 0, 1, 1], [], []>} : vector<8x32xf32>, vector<32x32xf32>, vector<8x32xf32> -> vector<8x32xf32>
      %c0_75 = arith.constant 0 : index
      %c0_76 = arith.constant 0 : index
      %152 = vector.load %arg6[%c0_75, %c0_76] : memref<1x32xf32, #tpu.memory_space<vmem>>, vector<1x32xf32>
      %153 = vector.broadcast %152 : vector<1x32xf32> to vector<8x32xf32>
      %154 = arith.addf %151, %153 : vector<8x32xf32>
      %155 = tpu.transpose %154, [1, 0] : vector<8x32xf32> -> vector<32x8xf32>
      %c0_77 = arith.constant 0 : index
      %c0_78 = arith.constant 0 : index
      %156 = vector.load %arg13[%c0_77, %c0_78] : memref<32x8xf32, #tpu.memory_space<vmem>>, vector<32x8xf32>
      tpu.vector_store %arg13[%c0_77, %c0_78], %155 {strides = array<i32>} : memref<32x8xf32, #tpu.memory_space<vmem>>, vector<32x8xf32>,
      %c0_79 = arith.constant 0 : index
      %c0_80 = arith.constant 0 : index
      %157 = vector.load %arg7[%c0_79, %c0_80] : memref<32x32xf32, #tpu.memory_space<vmem>>, vector<32x32xf32>
      %cst_81 = arith.constant dense<0.000000e+00> : vector<8x32xf32>
      %158 = tpu.matmul %149, %157, %cst_81 {dimension_numbers = #tpu.dot_dimension_numbers<[1], [0], [0], [1], [0, 0, 1, 1], [], []>} : vector<8x32xf32>, vector<32x32xf32>, vector<8x32xf32> -> vector<8x32xf32>
      %c0_82 = arith.constant 0 : index
      %c0_83 = arith.constant 0 : index
      %159 = vector.load %arg8[%c0_82, %c0_83] : memref<1x32xf32, #tpu.memory_space<vmem>>, vector<1x32xf32>
      %160 = vector.broadcast %159 : vector<1x32xf32> to vector<8x32xf32>
      %161 = arith.addf %158, %160 : vector<8x32xf32>
      %162 = tpu.transpose %161, [1, 0] : vector<8x32xf32> -> vector<32x8xf32>
      %c0_84 = arith.constant 0 : index
      %c0_85 = arith.constant 0 : index
      %163 = vector.load %arg14[%c0_84, %c0_85] : memref<32x8xf32, #tpu.memory_space<vmem>>, vector<32x8xf32>
      tpu.vector_store %arg14[%c0_84, %c0_85], %162 {strides = array<i32>} : memref<32x8xf32, #tpu.memory_space<vmem>>, vector<32x8xf32>,
      %c0_86 = arith.constant 0 : index
      %c0_87 = arith.constant 0 : index
      %164 = vector.load %arg9[%c0_86, %c0_87] : memref<32x4xf32, #tpu.memory_space<vmem>>, vector<32x4xf32>
      %cst_88 = arith.constant dense<0.000000e+00> : vector<8x4xf32>
      %165 = tpu.matmul %149, %164, %cst_88 {dimension_numbers = #tpu.dot_dimension_numbers<[1], [0], [0], [1], [0, 0, 1, 1], [], []>} : vector<8x32xf32>, vector<32x4xf32>, vector<8x4xf32> -> vector<8x4xf32>
      %c0_89 = arith.constant 0 : index
      %c0_90 = arith.constant 0 : index
      %166 = vector.load %arg10[%c0_89, %c0_90] : memref<1x4xf32, #tpu.memory_space<vmem>>, vector<1x4xf32>
      %167 = vector.broadcast %166 : vector<1x4xf32> to vector<8x4xf32>
      %168 = arith.addf %165, %167 : vector<8x4xf32>
      %169 = tpu.transpose %168, [1, 0] : vector<8x4xf32> -> vector<4x8xf32>
      %c0_91 = arith.constant 0 : index
      %c0_92 = arith.constant 0 : index
      %170 = vector.load %arg15[%c0_91, %c0_92] : memref<4x8xf32, #tpu.memory_space<vmem>>, vector<4x8xf32>
      tpu.vector_store %arg15[%c0_91, %c0_92], %169 {strides = array<i32>} : memref<4x8xf32, #tpu.memory_space<vmem>>, vector<4x8xf32>,
      %cst_93 = arith.constant 0.000000e+00 : f32
      %171 = vector.broadcast %cst_93 : f32 to vector<3x8xf32>
      %c0_94 = arith.constant 0 : index
      %c0_95 = arith.constant 0 : index
      %172 = vector.load %arg16[%c0_94, %c0_95] : memref<3x8xf32, #tpu.memory_space<vmem>>, vector<3x8xf32>
      tpu.vector_store %arg16[%c0_94, %c0_95], %171 {strides = array<i32>} : memref<3x8xf32, #tpu.memory_space<vmem>>, vector<3x8xf32>,
    } else {
    }
    %c0 = arith.constant 0 : index
    %c0_1 = arith.constant 0 : index
    %c0_2 = arith.constant 0 : index
    %c0_3 = arith.constant 0 : index
    %3 = vector.load %arg3[%c0, %c0_1, %c0_2, %c0_3] : memref<1x3x8x8xf32, #tpu.memory_space<vmem>>, vector<1x3x8x8xf32>
    %4 = vector.shape_cast %3 : vector<1x3x8x8xf32> to vector<3x8x8xf32>
    %c0_i32_4 = arith.constant 0 : i32
    %c4_i32 = arith.constant 4 : i32
    %5 = arith.muli %arg1, %c4_i32 : i32
    %6 = arith.addi %5, %c0_i32_4 : i32
    %c8_i32 = arith.constant 8 : i32
    %7 = arith.muli %6, %c8_i32 : i32
    %8 = tpu.assume_multiple %7, 8 : i32
    %9 = arith.index_cast %8 : i32 to index
    %c0_5 = arith.constant 0 : index
    %10 = vector.load %arg13[%9, %c0_5] : memref<32x8xf32, #tpu.memory_space<vmem>>, vector<8x8xf32>
    %11 = arith.truncf %10 : vector<8x8xf32> to vector<8x8xbf16>
    %12 = arith.index_cast %8 : i32 to index
    %c0_6 = arith.constant 0 : index
    %13 = vector.load %arg14[%12, %c0_6] : memref<32x8xf32, #tpu.memory_space<vmem>>, vector<8x8xf32>
    %14 = arith.truncf %13 : vector<8x8xf32> to vector<8x8xbf16>
    %cst = arith.constant dense<0.000000e+00> : vector<8x8xf32>
    %15 = tpu.matmul %11, %14, %cst {dimension_numbers = #tpu.dot_dimension_numbers<[0], [0], [1], [1], [0, 1, 1, 1], [], []>} : vector<8x8xbf16>, vector<8x8xbf16>, vector<8x8xf32> -> vector<8x8xf32>
    %c0_7 = arith.constant 0 : index
    %16 = arith.index_cast %c0_i32_4 : i32 to index
    %c0_8 = arith.constant 0 : index
    %c0_9 = arith.constant 0 : index
    %17 = vector.load %arg4[%c0_7, %16, %c0_8, %c0_9] : memref<1x4x8x8xf32, #tpu.memory_space<vmem>>, vector<1x1x8x8xf32>
    %18 = vector.shape_cast %17 : vector<1x1x8x8xf32> to vector<8x8xf32>
    %19 = arith.addf %15, %18 : vector<8x8xf32>
    %cst_10 = arith.constant dense<0xFF800000> : vector<8xf32>
    %20 = vector.multi_reduction <maximumf>, %19, %cst_10 [1] : vector<8x8xf32> to vector<8xf32>
    %21 = vector.shape_cast %20 : vector<8xf32> to vector<8x1xf32>
    %22 = vector.broadcast %21 : vector<8x1xf32> to vector<8x8xf32>
    %23 = arith.subf %19, %22 : vector<8x8xf32>
    %24 = math.exp %23 : vector<8x8xf32>
    %cst_11 = arith.constant dense<0.000000e+00> : vector<8xf32>
    %25 = vector.multi_reduction <add>, %24, %cst_11 [1] : vector<8x8xf32> to vector<8xf32>
    %26 = vector.shape_cast %25 : vector<8xf32> to vector<8x1xf32>
    %27 = vector.broadcast %26 : vector<8x1xf32> to vector<8x8xf32>
    %28 = arith.divf %24, %27 : vector<8x8xf32>
    %29 = arith.index_cast %6 : i32 to index
    %c0_12 = arith.constant 0 : index
    %30 = vector.load %arg15[%29, %c0_12] : memref<4x8xf32, #tpu.memory_space<vmem>>, vector<1x8xf32>
    %31 = vector.broadcast %30 : vector<1x8xf32> to vector<8x8xf32>
    %32 = arith.mulf %28, %31 : vector<8x8xf32>
    %c0_13 = arith.constant 0 : index
    %c0_14 = arith.constant 0 : index
    %33 = vector.load %arg16[%c0_13, %c0_14] : memref<3x8xf32, #tpu.memory_space<vmem>>, vector<3x8xf32>
    %34 = vector.shape_cast %32 : vector<8x8xf32> to vector<1x8x8xf32>
    %35 = vector.broadcast %34 : vector<1x8x8xf32> to vector<3x8x8xf32>
    %36 = arith.mulf %4, %35 : vector<3x8x8xf32>
    %cst_15 = arith.constant dense<0.000000e+00> : vector<3x8xf32>
    %37 = vector.multi_reduction <add>, %36, %cst_15 [2] : vector<3x8x8xf32> to vector<3x8xf32>
    %38 = arith.addf %33, %37 : vector<3x8xf32>
    %c0_16 = arith.constant 0 : index
    %c0_17 = arith.constant 0 : index
    %39 = vector.load %arg16[%c0_16, %c0_17] : memref<3x8xf32, #tpu.memory_space<vmem>>, vector<3x8xf32>
    tpu.vector_store %arg16[%c0_16, %c0_17], %38 {strides = array<i32>} : memref<3x8xf32, #tpu.memory_space<vmem>>, vector<3x8xf32>,
    %c1_i32 = arith.constant 1 : i32
    %c4_i32_18 = arith.constant 4 : i32
    %40 = arith.muli %arg1, %c4_i32_18 : i32
    %41 = arith.addi %40, %c1_i32 : i32
    %c8_i32_19 = arith.constant 8 : i32
    %42 = arith.muli %41, %c8_i32_19 : i32
    %43 = tpu.assume_multiple %42, 8 : i32
    %44 = arith.index_cast %43 : i32 to index
    %c0_20 = arith.constant 0 : index
    %45 = vector.load %arg13[%44, %c0_20] : memref<32x8xf32, #tpu.memory_space<vmem>>, vector<8x8xf32>
    %46 = arith.truncf %45 : vector<8x8xf32> to vector<8x8xbf16>
    %47 = arith.index_cast %43 : i32 to index
    %c0_21 = arith.constant 0 : index
    %48 = vector.load %arg14[%47, %c0_21] : memref<32x8xf32, #tpu.memory_space<vmem>>, vector<8x8xf32>
    %49 = arith.truncf %48 : vector<8x8xf32> to vector<8x8xbf16>
    %cst_22 = arith.constant dense<0.000000e+00> : vector<8x8xf32>
    %50 = tpu.matmul %46, %49, %cst_22 {dimension_numbers = #tpu.dot_dimension_numbers<[0], [0], [1], [1], [0, 1, 1, 1], [], []>} : vector<8x8xbf16>, vector<8x8xbf16>, vector<8x8xf32> -> vector<8x8xf32>
    %c0_23 = arith.constant 0 : index
    %51 = arith.index_cast %c1_i32 : i32 to index
    %c0_24 = arith.constant 0 : index
    %c0_25 = arith.constant 0 : index
    %52 = vector.load %arg4[%c0_23, %51, %c0_24, %c0_25] : memref<1x4x8x8xf32, #tpu.memory_space<vmem>>, vector<1x1x8x8xf32>
    %53 = vector.shape_cast %52 : vector<1x1x8x8xf32> to vector<8x8xf32>
    %54 = arith.addf %50, %53 : vector<8x8xf32>
    %cst_26 = arith.constant dense<0xFF800000> : vector<8xf32>
    %55 = vector.multi_reduction <maximumf>, %54, %cst_26 [1] : vector<8x8xf32> to vector<8xf32>
    %56 = vector.shape_cast %55 : vector<8xf32> to vector<8x1xf32>
    %57 = vector.broadcast %56 : vector<8x1xf32> to vector<8x8xf32>
    %58 = arith.subf %54, %57 : vector<8x8xf32>
    %59 = math.exp %58 : vector<8x8xf32>
    %cst_27 = arith.constant dense<0.000000e+00> : vector<8xf32>
    %60 = vector.multi_reduction <add>, %59, %cst_27 [1] : vector<8x8xf32> to vector<8xf32>
    %61 = vector.shape_cast %60 : vector<8xf32> to vector<8x1xf32>
    %62 = vector.broadcast %61 : vector<8x1xf32> to vector<8x8xf32>
    %63 = arith.divf %59, %62 : vector<8x8xf32>
    %64 = arith.index_cast %41 : i32 to index
    %c0_28 = arith.constant 0 : index
    %65 = vector.load %arg15[%64, %c0_28] : memref<4x8xf32, #tpu.memory_space<vmem>>, vector<1x8xf32>
    %66 = vector.broadcast %65 : vector<1x8xf32> to vector<8x8xf32>
    %67 = arith.mulf %63, %66 : vector<8x8xf32>
    %c0_29 = arith.constant 0 : index
    %c0_30 = arith.constant 0 : index
    %68 = vector.load %arg16[%c0_29, %c0_30] : memref<3x8xf32, #tpu.memory_space<vmem>>, vector<3x8xf32>
    %69 = vector.shape_cast %67 : vector<8x8xf32> to vector<1x8x8xf32>
    %70 = vector.broadcast %69 : vector<1x8x8xf32> to vector<3x8x8xf32>
    %71 = arith.mulf %4, %70 : vector<3x8x8xf32>
    %cst_31 = arith.constant dense<0.000000e+00> : vector<3x8xf32>
    %72 = vector.multi_reduction <add>, %71, %cst_31 [2] : vector<3x8x8xf32> to vector<3x8xf32>
    %73 = arith.addf %68, %72 : vector<3x8xf32>
    %c0_32 = arith.constant 0 : index
    %c0_33 = arith.constant 0 : index
    %74 = vector.load %arg16[%c0_32, %c0_33] : memref<3x8xf32, #tpu.memory_space<vmem>>, vector<3x8xf32>
    tpu.vector_store %arg16[%c0_32, %c0_33], %73 {strides = array<i32>} : memref<3x8xf32, #tpu.memory_space<vmem>>, vector<3x8xf32>,
    %c2_i32 = arith.constant 2 : i32
    %c4_i32_34 = arith.constant 4 : i32
    %75 = arith.muli %arg1, %c4_i32_34 : i32
    %76 = arith.addi %75, %c2_i32 : i32
    %c8_i32_35 = arith.constant 8 : i32
    %77 = arith.muli %76, %c8_i32_35 : i32
    %78 = tpu.assume_multiple %77, 8 : i32
    %79 = arith.index_cast %78 : i32 to index
    %c0_36 = arith.constant 0 : index
    %80 = vector.load %arg13[%79, %c0_36] : memref<32x8xf32, #tpu.memory_space<vmem>>, vector<8x8xf32>
    %81 = arith.truncf %80 : vector<8x8xf32> to vector<8x8xbf16>
    %82 = arith.index_cast %78 : i32 to index
    %c0_37 = arith.constant 0 : index
    %83 = vector.load %arg14[%82, %c0_37] : memref<32x8xf32, #tpu.memory_space<vmem>>, vector<8x8xf32>
    %84 = arith.truncf %83 : vector<8x8xf32> to vector<8x8xbf16>
    %cst_38 = arith.constant dense<0.000000e+00> : vector<8x8xf32>
    %85 = tpu.matmul %81, %84, %cst_38 {dimension_numbers = #tpu.dot_dimension_numbers<[0], [0], [1], [1], [0, 1, 1, 1], [], []>} : vector<8x8xbf16>, vector<8x8xbf16>, vector<8x8xf32> -> vector<8x8xf32>
    %c0_39 = arith.constant 0 : index
    %86 = arith.index_cast %c2_i32 : i32 to index
    %c0_40 = arith.constant 0 : index
    %c0_41 = arith.constant 0 : index
    %87 = vector.load %arg4[%c0_39, %86, %c0_40, %c0_41] : memref<1x4x8x8xf32, #tpu.memory_space<vmem>>, vector<1x1x8x8xf32>
    %88 = vector.shape_cast %87 : vector<1x1x8x8xf32> to vector<8x8xf32>
    %89 = arith.addf %85, %88 : vector<8x8xf32>
    %cst_42 = arith.constant dense<0xFF800000> : vector<8xf32>
    %90 = vector.multi_reduction <maximumf>, %89, %cst_42 [1] : vector<8x8xf32> to vector<8xf32>
    %91 = vector.shape_cast %90 : vector<8xf32> to vector<8x1xf32>
    %92 = vector.broadcast %91 : vector<8x1xf32> to vector<8x8xf32>
    %93 = arith.subf %89, %92 : vector<8x8xf32>
    %94 = math.exp %93 : vector<8x8xf32>
    %cst_43 = arith.constant dense<0.000000e+00> : vector<8xf32>
    %95 = vector.multi_reduction <add>, %94, %cst_43 [1] : vector<8x8xf32> to vector<8xf32>
    %96 = vector.shape_cast %95 : vector<8xf32> to vector<8x1xf32>
    %97 = vector.broadcast %96 : vector<8x1xf32> to vector<8x8xf32>
    %98 = arith.divf %94, %97 : vector<8x8xf32>
    %99 = arith.index_cast %76 : i32 to index
    %c0_44 = arith.constant 0 : index
    %100 = vector.load %arg15[%99, %c0_44] : memref<4x8xf32, #tpu.memory_space<vmem>>, vector<1x8xf32>
    %101 = vector.broadcast %100 : vector<1x8xf32> to vector<8x8xf32>
    %102 = arith.mulf %98, %101 : vector<8x8xf32>
    %c0_45 = arith.constant 0 : index
    %c0_46 = arith.constant 0 : index
    %103 = vector.load %arg16[%c0_45, %c0_46] : memref<3x8xf32, #tpu.memory_space<vmem>>, vector<3x8xf32>
    %104 = vector.shape_cast %102 : vector<8x8xf32> to vector<1x8x8xf32>
    %105 = vector.broadcast %104 : vector<1x8x8xf32> to vector<3x8x8xf32>
    %106 = arith.mulf %4, %105 : vector<3x8x8xf32>
    %cst_47 = arith.constant dense<0.000000e+00> : vector<3x8xf32>
    %107 = vector.multi_reduction <add>, %106, %cst_47 [2] : vector<3x8x8xf32> to vector<3x8xf32>
    %108 = arith.addf %103, %107 : vector<3x8xf32>
    %c0_48 = arith.constant 0 : index
    %c0_49 = arith.constant 0 : index
    %109 = vector.load %arg16[%c0_48, %c0_49] : memref<3x8xf32, #tpu.memory_space<vmem>>, vector<3x8xf32>
    tpu.vector_store %arg16[%c0_48, %c0_49], %108 {strides = array<i32>} : memref<3x8xf32, #tpu.memory_space<vmem>>, vector<3x8xf32>,
    %c3_i32 = arith.constant 3 : i32
    %c4_i32_50 = arith.constant 4 : i32
    %110 = arith.muli %arg1, %c4_i32_50 : i32
    %111 = arith.addi %110, %c3_i32 : i32
    %c8_i32_51 = arith.constant 8 : i32
    %112 = arith.muli %111, %c8_i32_51 : i32
    %113 = tpu.assume_multiple %112, 8 : i32
    %114 = arith.index_cast %113 : i32 to index
    %c0_52 = arith.constant 0 : index
    %115 = vector.load %arg13[%114, %c0_52] : memref<32x8xf32, #tpu.memory_space<vmem>>, vector<8x8xf32>
    %116 = arith.truncf %115 : vector<8x8xf32> to vector<8x8xbf16>
    %117 = arith.index_cast %113 : i32 to index
    %c0_53 = arith.constant 0 : index
    %118 = vector.load %arg14[%117, %c0_53] : memref<32x8xf32, #tpu.memory_space<vmem>>, vector<8x8xf32>
    %119 = arith.truncf %118 : vector<8x8xf32> to vector<8x8xbf16>
    %cst_54 = arith.constant dense<0.000000e+00> : vector<8x8xf32>
    %120 = tpu.matmul %116, %119, %cst_54 {dimension_numbers = #tpu.dot_dimension_numbers<[0], [0], [1], [1], [0, 1, 1, 1], [], []>} : vector<8x8xbf16>, vector<8x8xbf16>, vector<8x8xf32> -> vector<8x8xf32>
    %c0_55 = arith.constant 0 : index
    %121 = arith.index_cast %c3_i32 : i32 to index
    %c0_56 = arith.constant 0 : index
    %c0_57 = arith.constant 0 : index
    %122 = vector.load %arg4[%c0_55, %121, %c0_56, %c0_57] : memref<1x4x8x8xf32, #tpu.memory_space<vmem>>, vector<1x1x8x8xf32>
    %123 = vector.shape_cast %122 : vector<1x1x8x8xf32> to vector<8x8xf32>
    %124 = arith.addf %120, %123 : vector<8x8xf32>
    %cst_58 = arith.constant dense<0xFF800000> : vector<8xf32>
    %125 = vector.multi_reduction <maximumf>, %124, %cst_58 [1] : vector<8x8xf32> to vector<8xf32>
    %126 = vector.shape_cast %125 : vector<8xf32> to vector<8x1xf32>
    %127 = vector.broadcast %126 : vector<8x1xf32> to vector<8x8xf32>
    %128 = arith.subf %124, %127 : vector<8x8xf32>
    %129 = math.exp %128 : vector<8x8xf32>
    %cst_59 = arith.constant dense<0.000000e+00> : vector<8xf32>
    %130 = vector.multi_reduction <add>, %129, %cst_59 [1] : vector<8x8xf32> to vector<8xf32>
    %131 = vector.shape_cast %130 : vector<8xf32> to vector<8x1xf32>
    %132 = vector.broadcast %131 : vector<8x1xf32> to vector<8x8xf32>
    %133 = arith.divf %129, %132 : vector<8x8xf32>
    %134 = arith.index_cast %111 : i32 to index
    %c0_60 = arith.constant 0 : index
    %135 = vector.load %arg15[%134, %c0_60] : memref<4x8xf32, #tpu.memory_space<vmem>>, vector<1x8xf32>
    %136 = vector.broadcast %135 : vector<1x8xf32> to vector<8x8xf32>
    %137 = arith.mulf %133, %136 : vector<8x8xf32>
    %c0_61 = arith.constant 0 : index
    %c0_62 = arith.constant 0 : index
    %138 = vector.load %arg16[%c0_61, %c0_62] : memref<3x8xf32, #tpu.memory_space<vmem>>, vector<3x8xf32>
    %139 = vector.shape_cast %137 : vector<8x8xf32> to vector<1x8x8xf32>
    %140 = vector.broadcast %139 : vector<1x8x8xf32> to vector<3x8x8xf32>
    %141 = arith.mulf %4, %140 : vector<3x8x8xf32>
    %cst_63 = arith.constant dense<0.000000e+00> : vector<3x8xf32>
    %142 = vector.multi_reduction <add>, %141, %cst_63 [2] : vector<3x8x8xf32> to vector<3x8xf32>
    %143 = arith.addf %138, %142 : vector<3x8xf32>
    %c0_64 = arith.constant 0 : index
    %c0_65 = arith.constant 0 : index
    %144 = vector.load %arg16[%c0_64, %c0_65] : memref<3x8xf32, #tpu.memory_space<vmem>>, vector<3x8xf32>
    tpu.vector_store %arg16[%c0_64, %c0_65], %143 {strides = array<i32>} : memref<3x8xf32, #tpu.memory_space<vmem>>, vector<3x8xf32>,
    %c4_i32_66 = arith.constant 4 : i32
    %c0_i32_67 = arith.constant 0 : i32
    %145 = arith.cmpi eq, %arg1, %c0_i32_67 : i32
    %146 = arith.extui %145 : i1 to i32
    %c0_i32_68 = arith.constant 0 : i32
    %147 = arith.cmpi ne, %146, %c0_i32_68 : i32
    scf.if %147 {
      %c0_69 = arith.constant 0 : index
      %c0_70 = arith.constant 0 : index
      %148 = vector.load %arg16[%c0_69, %c0_70] : memref<3x8xf32, #tpu.memory_space<vmem>>, vector<3x8xf32>
      %c0_71 = arith.constant 0 : index
      %149 = memref.load %arg11[%c0_71] : memref<1xf32, #tpu.memory_space<smem>>
      %150 = vector.broadcast %149 : f32 to vector<3x8xf32>
      %151 = arith.addf %148, %150 : vector<3x8xf32>
      %c0_72 = arith.constant 0 : index
      %c0_73 = arith.constant 0 : index
      %c0_74 = arith.constant 0 : index
      %152 = vector.load %arg12[%c0_72, %c0_73, %c0_74] : memref<1x3x8xf32, #tpu.memory_space<vmem>>, vector<1x3x8xf32>
      %153 = vector.shape_cast %152 : vector<1x3x8xf32> to vector<3x8xf32>
      %154 = vector.shape_cast %151 : vector<3x8xf32> to vector<1x3x8xf32>
      tpu.vector_store %arg12[%c0_72, %c0_73, %c0_74], %154 {strides = array<i32>} : memref<1x3x8xf32, #tpu.memory_space<vmem>>, vector<1x3x8xf32>,
    } else {
    }
    return
  }
  func.func @transform_0(%arg0: i32, %arg1: i32) -> (i32, i32, i32) {
    %c0_i32 = arith.constant 0 : i32
    %c0_i32_0 = arith.constant 0 : i32
    %c0_i32_1 = arith.constant 0 : i32
    return %arg0, %c0_i32, %c0_i32_0 : i32, i32, i32
  }
  func.func @transform_1(%arg0: i32, %arg1: i32) -> (i32, i32, i32, i32) {
    %c0_i32 = arith.constant 0 : i32
    %c0_i32_0 = arith.constant 0 : i32
    %c0_i32_1 = arith.constant 0 : i32
    %c0_i32_2 = arith.constant 0 : i32
    return %arg0, %c0_i32, %c0_i32_0, %c0_i32_1 : i32, i32, i32, i32
  }
  func.func @transform_2(%arg0: i32, %arg1: i32) -> (i32, i32, i32, i32) {
    %c0_i32 = arith.constant 0 : i32
    %c0_i32_0 = arith.constant 0 : i32
    %c0_i32_1 = arith.constant 0 : i32
    return %arg0, %arg1, %c0_i32, %c0_i32_0 : i32, i32, i32, i32
  }
  func.func @transform_3(%arg0: i32, %arg1: i32) -> (i32, i32) {
    %c0_i32 = arith.constant 0 : i32
    %c0_i32_0 = arith.constant 0 : i32
    %c0_i32_1 = arith.constant 0 : i32
    return %c0_i32, %c0_i32_0 : i32, i32
  }
  func.func @transform_4(%arg0: i32, %arg1: i32) -> (i32, i32) {
    %c0_i32 = arith.constant 0 : i32
    %c0_i32_0 = arith.constant 0 : i32
    %c0_i32_1 = arith.constant 0 : i32
    return %c0_i32, %c0_i32_0 : i32, i32
  }
  func.func @transform_5(%arg0: i32, %arg1: i32) -> (i32, i32) {
    %c0_i32 = arith.constant 0 : i32
    %c0_i32_0 = arith.constant 0 : i32
    %c0_i32_1 = arith.constant 0 : i32
    return %c0_i32, %c0_i32_0 : i32, i32
  }
  func.func @transform_6(%arg0: i32, %arg1: i32) -> (i32, i32) {
    %c0_i32 = arith.constant 0 : i32
    %c0_i32_0 = arith.constant 0 : i32
    %c0_i32_1 = arith.constant 0 : i32
    return %c0_i32, %c0_i32_0 : i32, i32
  }
  func.func @transform_7(%arg0: i32, %arg1: i32) -> (i32, i32) {
    %c0_i32 = arith.constant 0 : i32
    %c0_i32_0 = arith.constant 0 : i32
    %c0_i32_1 = arith.constant 0 : i32
    return %c0_i32, %c0_i32_0 : i32, i32
  }
  func.func @transform_8(%arg0: i32, %arg1: i32) -> (i32, i32) {
    %c0_i32 = arith.constant 0 : i32
    %c0_i32_0 = arith.constant 0 : i32
    %c0_i32_1 = arith.constant 0 : i32
    return %c0_i32, %c0_i32_0 : i32, i32
  }
  func.func @transform_9(%arg0: i32, %arg1: i32) -> i32 {
    %c0_i32 = arith.constant 0 : i32
    %c0_i32_0 = arith.constant 0 : i32
    return %c0_i32 : i32
  }
  func.func @transform_10(%arg0: i32, %arg1: i32) -> (i32, i32, i32) {
    %c0_i32 = arith.constant 0 : i32
    %c0_i32_0 = arith.constant 0 : i32
    %c0_i32_1 = arith.constant 0 : i32
    return %arg0, %c0_i32, %c0_i32_0 : i32, i32, i32
  }
}

</mosaic_0001>

<llo_original>
// kernel: tpu_custom_call.1
$region0: #{tpu_custom_call.1}
  #allocation0 [shape = 'u32[]', space=smem, size = 0x4, offset = 0x4, fixed_abs, tag = 'smem constant byte address 0x4 - core index']
  #allocation1 [shape = 'u32[144,128]{1,0:T(1,128)}', space=vmem, size = 0x12000, scoped, tag = 'internal scratch']
  #allocation2 [shape = 'f32[32,8]{1,0:T(8,128)}', space=vmem, size = 0x4000, scoped, tag = 'scratch operand']
  #allocation3 [shape = 'f32[32,8]{1,0:T(8,128)}', space=vmem, size = 0x4000, scoped, tag = 'scratch operand']
  #allocation4 [shape = 'f32[4,8]{1,0:T(4,128)}', space=vmem, size = 0x800, scoped, tag = 'scratch operand']
  #allocation5 [shape = 'f32[3,8]{1,0:T(4,128)}', space=vmem, size = 0x800, scoped, tag = 'scratch operand']
  #allocation6 [shape = 'f32[1]{0:T(128)S(6)}', space=smem, size = 0x200, scoped, tag = 'scoped memory for tpu_custom_call.1']
  %s0 = inlined_call_operand.hbm [shape: f32[2,8,32], index: 0, kind: input, shape index: {}]
  %s1 = inlined_call_operand.hbm [shape: f32[2,3,8,8], index: 1, kind: input, shape index: {}]
  %s2 = inlined_call_operand.hbm [shape: f32[2,4,8,8], index: 2, kind: input, shape index: {}]
  %s3 = inlined_call_operand.vmem [shape: f32[32,32], index: 3, kind: input, shape index: {}]
  %s4 = inlined_call_operand.vmem [shape: f32[1,32], index: 4, kind: input, shape index: {}]
  %s5 = inlined_call_operand.hbm [shape: f32[32,32], index: 5, kind: input, shape index: {}]
  %s6 = inlined_call_operand.vmem [shape: f32[1,32], index: 6, kind: input, shape index: {}]
  %s7 = inlined_call_operand.vmem [shape: f32[32,4], index: 7, kind: input, shape index: {}]
  %s8 = inlined_call_operand.vmem [shape: f32[1,4], index: 8, kind: input, shape index: {}]
  %s9 = inlined_call_operand.<no memory space> [shape: f32[1], index: 9, kind: input, shape index: {}]
  %s10 = inlined_call_operand.vmem [shape: f32[2,3,8], index: 10, kind: output, shape index: {}]
  %s11 = sld [smem:[#allocation0]]
  $region97: #{tpu_custom_call.1} parent=0
    _
  %s13 = ssub.s32 1, %s11
  %s14 = scalar_select 0, %s13, %s11
  %15 = sst [smem:[#allocation6]] %s9
  $region1: #{tpu_custom_call.1} parent=0
    #allocation7 [shape = 'u8[8192]{0}', space=vmem, size = 0x2000, scoped, tag = 'input window, operand 0']
    #allocation8 [shape = 's32[2]{0}', space=sflag, size = 0x8, scoped, tag = 'scoped memory for tpu_custom_call.1']
    #allocation9 [shape = 'u8[24576]{0}', space=vmem, size = 0x6000, scoped, tag = 'input window, operand 1']
    #allocation10 [shape = 's32[2]{0}', space=sflag, size = 0x8, scoped, tag = 'scoped memory for tpu_custom_call.1']
    #allocation11 [shape = 'u8[32768]{0}', space=vmem, size = 0x8000, scoped, tag = 'input window, operand 2']
    #allocation12 [shape = 'u8[16384]{0}', space=vmem, size = 0x4000, scoped, tag = 'input window, operand 5, single buffered']
    #allocation13 [shape = 's32[1]{0}', space=sflag, size = 0x4, scoped, tag = 'scoped memory for tpu_custom_call.1']
    %16 = vsyncpa [#allocation8], 0
    %s17 = scalar_lea.sflag [#allocation8], 1
    %18 = vsyncpa %s17, 0
    %19 = vsyncpa [#allocation10], 0
    %s20 = scalar_lea.sflag [#allocation10], 1
    %21 = vsyncpa %s20, 0
    %22 = vsyncpa [#allocation13], 0
    loop: start=0, step=1, limit=4
    $region2: #{tpu_custom_call.1} parent=1 // loop_pre_header
      _
    $region3: #{tpu_custom_call.1} parent=1 // loop_header
      %s24 = sphi 0, %s28
      %p25 = scmp.ge.s32.totalorder %s24, 4
      %s31 = sphi 0, %s43
      %s32 = sphi 0, %s39
      %s33 = sphi 0, %s31
      %s34 = sphi 0, %s32
      %s35 = sphi 0, %s33
      %s36 = sphi 0, %s34
      %s46 = sphi 0, %s48
      %s49 = sphi 0, %s46
      %s50 = sphi 0, %s49
      %s66 = sphi 0, %s50
      %s72 = sphi 0, %s74
      %s75 = sphi 0, %s72
      %s76 = sphi 0, %s75
      %s92 = sphi 0, %s76
      %s100 = sphi 0, %s102
      %s103 = sphi 0, %s100
      %s104 = sphi 0, %s103
      %s120 = sphi 0, %s104
      %s124 = sphi 0, %s124
      %s126 = sphi 0, %s124
      %s127 = sphi 0, %s126
      %s141 = sphi 0, %s127
      %s145 = sphi 0, %s145
      %s147 = sphi 0, %s145
      %s148 = sphi 0, %s147
      %s162 = sphi 0, %s148
      %s166 = sphi 0, %s166
      %s168 = sphi 0, %s166
      %s169 = sphi 0, %s168
      %s183 = sphi 0, %s169
      %s187 = sphi 0, %s187
      %s189 = sphi 0, %s187
      %s190 = sphi 0, %s189
      %s204 = sphi 0, %s190
      %s208 = sphi 0, %s208
      %s210 = sphi 0, %s208
      %s211 = sphi 0, %s210
      %s225 = sphi 0, %s211
      %s229 = sphi 0, %s229
      %s231 = sphi 0, %s229
      %s232 = sphi 0, %s231
      %s246 = sphi 0, %s232
      %s250 = sphi 0, %s250
      %s252 = sphi 0, %s250
      %s253 = sphi 0, %s252
      %s267 = sphi 0, %s253
      %s273 = sphi 0, %s275
      %s276 = sphi 0, %s273
      %s277 = sphi 0, %s276
      %s293 = sphi 0, %s277
    $region4: #{tpu_custom_call.1} parent=1 // loop_header_branch
      %27 = sbr.rel (%p25) target = $region8
    $region5: #{tpu_custom_call.1} parent=1 // loop_body
      %s29 = ssub.s32 %s24, 1
      %s30 = ssub.s32 %s24, 2
      %s37 = sadd.s32 1, %s32
      %p38 = scmp.ge.s32.totalorder %s37, 1
      %s39 = scalar_select %p38, 0, %s37
      %s40 = sadd.s32 1, %s31
      %s41 = scalar_select %p38, %s40, %s31
      %p42 = scmp.ge.s32.totalorder %s41, 2
      %s43 = scalar_select %p42, 0, %s41
      %s44 = ssub.s32 %s31, %s43
      %p45 = scmp.eq.s32.totalorder %s44, 0
      %s47 = sadd.s32 %s46, 1
      %s48 = scalar_select %p45, %s46, %s47
      %p51 = pneg %p45
      %p52 = scmp.eq.s32.totalorder %s24, 1
      %p53 = por %p51, %p52
      %p54 = scmp.ne.s32.totalorder %s46, %s49
      %p55 = scmp.eq.s32.totalorder %s24, 0
      %p56 = por %p54, %p55
      %p57 = scmp.ne.s32.totalorder %s46, %s49
      %p58 = scmp.eq.s32.totalorder %s29, 1
      %p59 = por %p57, %p58
      %p60 = scmp.ne.s32.totalorder %s49, %s50
      %p61 = scmp.eq.s32.totalorder %s29, 0
      %p62 = por %p60, %p61
      %p63 = scmp.ne.s32.totalorder %s49, %s50
      %p64 = scmp.eq.s32.totalorder %s30, 1
      %p65 = por %p63, %p64
      %p67 = scmp.ne.s32.totalorder %s50, %s66
      %p68 = scmp.eq.s32.totalorder %s30, 0
      %p69 = por %p67, %p68
      %s70 = ssub.s32 %s31, %s43
      %p71 = scmp.eq.s32.totalorder %s70, 0
      %s73 = sadd.s32 %s72, 1
      %s74 = scalar_select %p71, %s72, %s73
      %p77 = pneg %p71
      %p78 = scmp.eq.s32.totalorder %s24, 1
      %p79 = por %p77, %p78
      %p80 = scmp.ne.s32.totalorder %s72, %s75
      %p81 = scmp.eq.s32.totalorder %s24, 0
      %p82 = por %p80, %p81
      %p83 = scmp.ne.s32.totalorder %s72, %s75
      %p84 = scmp.eq.s32.totalorder %s29, 1
      %p85 = por %p83, %p84
      %p86 = scmp.ne.s32.totalorder %s75, %s76
      %p87 = scmp.eq.s32.totalorder %s29, 0
      %p88 = por %p86, %p87
      %p89 = scmp.ne.s32.totalorder %s75, %s76
      %p90 = scmp.eq.s32.totalorder %s30, 1
      %p91 = por %p89, %p90
      %p93 = scmp.ne.s32.totalorder %s76, %s92
      %p94 = scmp.eq.s32.totalorder %s30, 0
      %p95 = por %p93, %p94
      %s96 = ssub.s32 %s31, %s43
      %s97 = ssub.s32 %s32, %s39
      %s98 = sor.u32 %s96, %s97
      %p99 = scmp.eq.s32.totalorder %s98, 0
      %s101 = sadd.s32 %s100, 1
      %s102 = scalar_select %p99, %s100, %s101
      %p105 = pneg %p99
      %p106 = scmp.eq.s32.totalorder %s24, 1
      %p107 = por %p105, %p106
      %p108 = scmp.ne.s32.totalorder %s100, %s103
      %p109 = scmp.eq.s32.totalorder %s24, 0
      %p110 = por %p108, %p109
      %p111 = scmp.ne.s32.totalorder %s100, %s103
      %p112 = scmp.eq.s32.totalorder %s29, 1
      %p113 = por %p111, %p112
      %p114 = scmp.ne.s32.totalorder %s103, %s104
      %p115 = scmp.eq.s32.totalorder %s29, 0
      %p116 = por %p114, %p115
      %p117 = scmp.ne.s32.totalorder %s103, %s104
      %p118 = scmp.eq.s32.totalorder %s30, 1
      %p119 = por %p117, %p118
      %p121 = scmp.ne.s32.totalorder %s104, %s120
      %p122 = scmp.eq.s32.totalorder %s30, 0
      %p123 = por %p121, %p122
      %s125 = sadd.s32 %s124, 1
      %p128 = scmp.eq.s32.totalorder %s24, 1
      %p129 = scmp.ne.s32.totalorder %s124, %s126
      %p130 = scmp.eq.s32.totalorder %s24, 0
      %p131 = por %p129, %p130
      %p132 = scmp.ne.s32.totalorder %s124, %s126
      %p133 = scmp.eq.s32.totalorder %s29, 1
      %p134 = por %p132, %p133
      %p135 = scmp.ne.s32.totalorder %s126, %s127
      %p136 = scmp.eq.s32.totalorder %s29, 0
      %p137 = por %p135, %p136
      %p138 = scmp.ne.s32.totalorder %s126, %s127
      %p139 = scmp.eq.s32.totalorder %s30, 1
      %p140 = por %p138, %p139
      %p142 = scmp.ne.s32.totalorder %s127, %s141
      %p143 = scmp.eq.s32.totalorder %s30, 0
      %p144 = por %p142, %p143
      %s146 = sadd.s32 %s145, 1
      %p149 = scmp.eq.s32.totalorder %s24, 1
      %p150 = scmp.ne.s32.totalorder %s145, %s147
      %p151 = scmp.eq.s32.totalorder %s24, 0
      %p152 = por %p150, %p151
      %p153 = scmp.ne.s32.totalorder %s145, %s147
      %p154 = scmp.eq.s32.totalorder %s29, 1
      %p155 = por %p153, %p154
      %p156 = scmp.ne.s32.totalorder %s147, %s148
      %p157 = scmp.eq.s32.totalorder %s29, 0
      %p158 = por %p156, %p157
      %p159 = scmp.ne.s32.totalorder %s147, %s148
      %p160 = scmp.eq.s32.totalorder %s30, 1
      %p161 = por %p159, %p160
      %p163 = scmp.ne.s32.totalorder %s148, %s162
      %p164 = scmp.eq.s32.totalorder %s30, 0
      %p165 = por %p163, %p164
      %s167 = sadd.s32 %s166, 1
      %p170 = scmp.eq.s32.totalorder %s24, 1
      %p171 = scmp.ne.s32.totalorder %s166, %s168
      %p172 = scmp.eq.s32.totalorder %s24, 0
      %p173 = por %p171, %p172
      %p174 = scmp.ne.s32.totalorder %s166, %s168
      %p175 = scmp.eq.s32.totalorder %s29, 1
      %p176 = por %p174, %p175
      %p177 = scmp.ne.s32.totalorder %s168, %s169
      %p178 = scmp.eq.s32.totalorder %s29, 0
      %p179 = por %p177, %p178
      %p180 = scmp.ne.s32.totalorder %s168, %s169
      %p181 = scmp.eq.s32.totalorder %s30, 1
      %p182 = por %p180, %p181
      %p184 = scmp.ne.s32.totalorder %s169, %s183
      %p185 = scmp.eq.s32.totalorder %s30, 0
      %p186 = por %p184, %p185
      %s188 = sadd.s32 %s187, 1
      %p191 = scmp.eq.s32.totalorder %s24, 1
      %p192 = scmp.ne.s32.totalorder %s187, %s189
      %p193 = scmp.eq.s32.totalorder %s24, 0
      %p194 = por %p192, %p193
      %p195 = scmp.ne.s32.totalorder %s187, %s189
      %p196 = scmp.eq.s32.totalorder %s29, 1
      %p197 = por %p195, %p196
      %p198 = scmp.ne.s32.totalorder %s189, %s190
      %p199 = scmp.eq.s32.totalorder %s29, 0
      %p200 = por %p198, %p199
      %p201 = scmp.ne.s32.totalorder %s189, %s190
      %p202 = scmp.eq.s32.totalorder %s30, 1
      %p203 = por %p201, %p202
      %p205 = scmp.ne.s32.totalorder %s190, %s204
      %p206 = scmp.eq.s32.totalorder %s30, 0
      %p207 = por %p205, %p206
      %s209 = sadd.s32 %s208, 1
      %p212 = scmp.eq.s32.totalorder %s24, 1
      %p213 = scmp.ne.s32.totalorder %s208, %s210
      %p214 = scmp.eq.s32.totalorder %s24, 0
      %p215 = por %p213, %p214
      %p216 = scmp.ne.s32.totalorder %s208, %s210
      %p217 = scmp.eq.s32.totalorder %s29, 1
      %p218 = por %p216, %p217
      %p219 = scmp.ne.s32.totalorder %s210, %s211
      %p220 = scmp.eq.s32.totalorder %s29, 0
      %p221 = por %p219, %p220
      %p222 = scmp.ne.s32.totalorder %s210, %s211
      %p223 = scmp.eq.s32.totalorder %s30, 1
      %p224 = por %p222, %p223
      %p226 = scmp.ne.s32.totalorder %s211, %s225
      %p227 = scmp.eq.s32.totalorder %s30, 0
      %p228 = por %p226, %p227
      %s230 = sadd.s32 %s229, 1
      %p233 = scmp.eq.s32.totalorder %s24, 1
      %p234 = scmp.ne.s32.totalorder %s229, %s231
      %p235 = scmp.eq.s32.totalorder %s24, 0
      %p236 = por %p234, %p235
      %p237 = scmp.ne.s32.totalorder %s229, %s231
      %p238 = scmp.eq.s32.totalorder %s29, 1
      %p239 = por %p237, %p238
      %p240 = scmp.ne.s32.totalorder %s231, %s232
      %p241 = scmp.eq.s32.totalorder %s29, 0
      %p242 = por %p240, %p241
      %p243 = scmp.ne.s32.totalorder %s231, %s232
      %p244 = scmp.eq.s32.totalorder %s30, 1
      %p245 = por %p243, %p244
      %p247 = scmp.ne.s32.totalorder %s232, %s246
      %p248 = scmp.eq.s32.totalorder %s30, 0
      %p249 = por %p247, %p248
      %s251 = sadd.s32 %s250, 1
      %p254 = scmp.eq.s32.totalorder %s24, 1
      %p255 = scmp.ne.s32.totalorder %s250, %s252
      %p256 = scmp.eq.s32.totalorder %s24, 0
      %p257 = por %p255, %p256
      %p258 = scmp.ne.s32.totalorder %s250, %s252
      %p259 = scmp.eq.s32.totalorder %s29, 1
      %p260 = por %p258, %p259
      %p261 = scmp.ne.s32.totalorder %s252, %s253
      %p262 = scmp.eq.s32.totalorder %s29, 0
      %p263 = por %p261, %p262
      %p264 = scmp.ne.s32.totalorder %s252, %s253
      %p265 = scmp.eq.s32.totalorder %s30, 1
      %p266 = por %p264, %p265
      %p268 = scmp.ne.s32.totalorder %s253, %s267
      %p269 = scmp.eq.s32.totalorder %s30, 0
      %p270 = por %p268, %p269
      %s271 = ssub.s32 %s31, %s43
      %p272 = scmp.eq.s32.totalorder %s271, 0
      %s274 = sadd.s32 %s273, 1
      %s275 = scalar_select %p272, %s273, %s274
      %p278 = pneg %p272
      %p279 = scmp.eq.s32.totalorder %s24, 1
      %p280 = por %p278, %p279
      %p281 = scmp.ne.s32.totalorder %s273, %s276
      %p282 = scmp.eq.s32.totalorder %s24, 0
      %p283 = por %p281, %p282
      %p284 = scmp.ne.s32.totalorder %s273, %s276
      %p285 = scmp.eq.s32.totalorder %s29, 1
      %p286 = por %p284, %p285
      %p287 = scmp.ne.s32.totalorder %s276, %s277
      %p288 = scmp.eq.s32.totalorder %s29, 0
      %p289 = por %p287, %p288
      %p290 = scmp.ne.s32.totalorder %s276, %s277
      %p291 = scmp.eq.s32.totalorder %s30, 1
      %p292 = por %p290, %p291
      %p294 = scmp.ne.s32.totalorder %s277, %s293
      %p295 = scmp.eq.s32.totalorder %s30, 0
      %p296 = por %p294, %p295
      %p297 = scmp.le.s32.totalorder 1, %s24
      %p298 = scmp.lt.s32.totalorder %s24, 3
      %p299 = pnand %p297, %p298
      %p300 = pneg %p299
      // Predicated region
      $region9: #{tpu_custom_call.1} parent=5 // pred_check
        _
      $region10: #{tpu_custom_call.1} parent=5 // pred_check_branch
        %302 = sbr.rel (%p299) target = $region12
      $region11: #{tpu_custom_call.1} parent=5 // pred_region
        %s303 = ssub.s32 %s24, 1
        // Predicated region
        $region13: #{tpu_custom_call.1} parent=11 // pred_check
          %p304 = pneg %p137
        $region14: #{tpu_custom_call.1} parent=11 // pred_check_branch
          %306 = sbr.rel (%p304) target = $region16
        $region15: #{tpu_custom_call.1} parent=11 // pred_region
          _
        $region16: #{tpu_custom_call.1} parent=11 // pred_fallthru
          _
        // Predicated region
        $region17: #{tpu_custom_call.1} parent=11 // pred_check
          %p307 = pneg %p158
        $region18: #{tpu_custom_call.1} parent=11 // pred_check_branch
          %309 = sbr.rel (%p307) target = $region20
        $region19: #{tpu_custom_call.1} parent=11 // pred_region
          _
        $region20: #{tpu_custom_call.1} parent=11 // pred_fallthru
          _
        // Predicated region
        $region21: #{tpu_custom_call.1} parent=11 // pred_check
          %p310 = pneg %p179
        $region22: #{tpu_custom_call.1} parent=11 // pred_check_branch
          %312 = sbr.rel (%p310) target = $region24
        $region23: #{tpu_custom_call.1} parent=11 // pred_region
          %s314 = ssub.s32 512, 512
          %315 = vsyncadd [#allocation13], %s314
          %s316 = sshll.u32 [#allocation12], 4
          %s317 = int_to_ptr.vmem [resolvable:$true] %s316
          %322 = dma.hbm_to_vmem [thread:$0]  %s5, 512, %s317, [#allocation13], 128, 128, 8
        $region24: #{tpu_custom_call.1} parent=11 // pred_fallthru
          _
        // Predicated region
        $region25: #{tpu_custom_call.1} parent=11 // pred_check
          %p323 = pneg %p200
        $region26: #{tpu_custom_call.1} parent=11 // pred_check_branch
          %325 = sbr.rel (%p323) target = $region28
        $region27: #{tpu_custom_call.1} parent=11 // pred_region
          _
        $region28: #{tpu_custom_call.1} parent=11 // pred_fallthru
          _
        // Predicated region
        $region29: #{tpu_custom_call.1} parent=11 // pred_check
          %p326 = pneg %p221
        $region30: #{tpu_custom_call.1} parent=11 // pred_check_branch
          %328 = sbr.rel (%p326) target = $region32
        $region31: #{tpu_custom_call.1} parent=11 // pred_region
          _
        $region32: #{tpu_custom_call.1} parent=11 // pred_fallthru
          _
        // Predicated region
        $region33: #{tpu_custom_call.1} parent=11 // pred_check
          %p329 = pneg %p242
        $region34: #{tpu_custom_call.1} parent=11 // pred_check_branch
          %331 = sbr.rel (%p329) target = $region36
        $region35: #{tpu_custom_call.1} parent=11 // pred_region
          _
        $region36: #{tpu_custom_call.1} parent=11 // pred_fallthru
          _
        // Predicated region
        $region37: #{tpu_custom_call.1} parent=11 // pred_check
          %p332 = pneg %p263
        $region38: #{tpu_custom_call.1} parent=11 // pred_check_branch
          %334 = sbr.rel (%p332) target = $region40
        $region39: #{tpu_custom_call.1} parent=11 // pred_region
          _
        $region40: #{tpu_custom_call.1} parent=11 // pred_fallthru
          _
      $region12: #{tpu_custom_call.1} parent=5 // pred_fallthru
        _
      %p335 = scmp.lt.s32.totalorder %s24, 2
      // Predicated region
      $region41: #{tpu_custom_call.1} parent=5 // pred_check
        %p336 = pneg %p335
      $region42: #{tpu_custom_call.1} parent=5 // pred_check_branch
        %338 = sbr.rel (%p336) target = $region44
      $region43: #{tpu_custom_call.1} parent=5 // pred_region
        // Predicated region
        $region45: #{tpu_custom_call.1} parent=43 // pred_check
          %p339 = pneg %p56
        $region46: #{tpu_custom_call.1} parent=43 // pred_check_branch
          %341 = sbr.rel (%p339) target = $region48
        $region47: #{tpu_custom_call.1} parent=43 // pred_region
          %s342 = sand.u32 %s46, 1
          %s343 = scalar_lea.sflag [#allocation8], %s342
          %s344 = sand.u32 %s46, 1
          %s345 = smul.addr %s344, 8
          %s346 = scalar_lea.vmem [#allocation7], %s345
          %s348 = ssub.s32 128, 128
          %349 = vsyncadd %s343, %s348
          %s350 = smul.addr %s31, 128
          %s351 = scalar_lea.hbm %s0, %s350
          %s353 = sshll.u32 %s346, 4
          %s354 = int_to_ptr.vmem [resolvable:$true] %s353
          %356 = dma.hbm_to_vmem [thread:$0]  %s351, 128, %s354, %s343
        $region48: #{tpu_custom_call.1} parent=43 // pred_fallthru
          _
        // Predicated region
        $region49: #{tpu_custom_call.1} parent=43 // pred_check
          %p357 = pneg %p82
        $region50: #{tpu_custom_call.1} parent=43 // pred_check_branch
          %359 = sbr.rel (%p357) target = $region52
        $region51: #{tpu_custom_call.1} parent=43 // pred_region
          %s360 = sand.u32 %s24, 1
          %s361 = scalar_lea.sflag [#allocation10], %s360
          %s362 = sand.u32 %s72, 1
          %s363 = smul.addr %s362, 24
          %s364 = scalar_lea.vmem [#allocation9], %s363
          %s366 = ssub.s32 384, 384
          %367 = vsyncadd %s361, %s366
          %s368 = smul.addr %s31, 3
          %s369 = smul.addr %s368, 128
          %s370 = scalar_lea.hbm %s1, %s369
          %s371 = sshll.u32 %s364, 4
          %s372 = int_to_ptr.vmem [resolvable:$true] %s371
          %377 = dma.hbm_to_vmem [thread:$0]  %s370, 384, %s372, %s361, 128, 128, 8
        $region52: #{tpu_custom_call.1} parent=43 // pred_fallthru
          _
        // Predicated region
        $region53: #{tpu_custom_call.1} parent=43 // pred_check
          %p378 = pneg %p110
        $region54: #{tpu_custom_call.1} parent=43 // pred_check_branch
          %380 = sbr.rel (%p378) target = $region56
        $region55: #{tpu_custom_call.1} parent=43 // pred_region
          %s381 = sand.u32 %s24, 1
          %s382 = scalar_lea.sflag [#allocation10], %s381
          %s383 = sand.u32 %s100, 1
          %s384 = smul.addr %s383, 32
          %s385 = scalar_lea.vmem [#allocation11], %s384
          %s386 = smul.u32 4, %s32
          %s388 = ssub.s32 512, 512
          %389 = vsyncadd %s382, %s388
          %s390 = smul.addr %s31, 4
          %s391 = sadd.s32 %s386, %s390
          %s392 = smul.addr %s391, 128
          %s393 = scalar_lea.hbm %s2, %s392
          %s394 = sshll.u32 %s385, 4
          %s395 = int_to_ptr.vmem [resolvable:$true] %s394
          %400 = dma.hbm_to_vmem [thread:$0]  %s393, 512, %s395, %s382, 128, 128, 8
        $region56: #{tpu_custom_call.1} parent=43 // pred_fallthru
          _
      $region44: #{tpu_custom_call.1} parent=5 // pred_fallthru
        _
      %p401 = scmp.le.s32.totalorder 1, %s24
      %p402 = scmp.lt.s32.totalorder %s24, 3
      %p403 = pnand %p401, %p402
      %p404 = pneg %p403
      // Predicated region
      $region57: #{tpu_custom_call.1} parent=5 // pred_check
        _
      $region58: #{tpu_custom_call.1} parent=5 // pred_check_branch
        %406 = sbr.rel (%p403) target = $region60
      $region59: #{tpu_custom_call.1} parent=5 // pred_region
        %s407 = ssub.s32 %s24, 1
        %s408 = sand.u32 %s49, 1
        %s409 = scalar_lea.sflag [#allocation8], %s408
        %s410 = sand.u32 %s49, 1
        %s411 = smul.addr %s410, 8
        %s412 = scalar_lea.vmem [#allocation7], %s411
        // Predicated region
        $region61: #{tpu_custom_call.1} parent=59 // pred_check
          %p413 = pneg %p62
        $region62: #{tpu_custom_call.1} parent=59 // pred_check_branch
          %415 = sbr.rel (%p413) target = $region64
        $region63: #{tpu_custom_call.1} parent=59 // pred_region
          %416 = dma.done %s409, 128
        $region64: #{tpu_custom_call.1} parent=59 // pred_fallthru
          _
        %s417 = sand.u32 %s29, 1
        %s418 = scalar_lea.sflag [#allocation10], %s417
        %s419 = sand.u32 %s75, 1
        %s420 = smul.addr %s419, 24
        %s421 = scalar_lea.vmem [#allocation9], %s420
        // Predicated region
        $region65: #{tpu_custom_call.1} parent=59 // pred_check
          %p422 = pneg %p88
        $region66: #{tpu_custom_call.1} parent=59 // pred_check_branch
          %424 = sbr.rel (%p422) target = $region68
        $region67: #{tpu_custom_call.1} parent=59 // pred_region
          %425 = dma.done %s418, 384
        $region68: #{tpu_custom_call.1} parent=59 // pred_fallthru
          _
        %s426 = sand.u32 %s29, 1
        %s427 = scalar_lea.sflag [#allocation10], %s426
        %s428 = sand.u32 %s103, 1
        %s429 = smul.addr %s428, 32
        %s430 = scalar_lea.vmem [#allocation11], %s429
        // Predicated region
        $region69: #{tpu_custom_call.1} parent=59 // pred_check
          %p431 = pneg %p116
        $region70: #{tpu_custom_call.1} parent=59 // pred_check_branch
          %433 = sbr.rel (%p431) target = $region72
        $region71: #{tpu_custom_call.1} parent=59 // pred_region
          %434 = dma.done %s427, 512
        $region72: #{tpu_custom_call.1} parent=59 // pred_fallthru
          _
        // Predicated region
        $region73: #{tpu_custom_call.1} parent=59 // pred_check
          %p435 = pneg %p179
        $region74: #{tpu_custom_call.1} parent=59 // pred_check_branch
          %437 = sbr.rel (%p435) target = $region76
        $region75: #{tpu_custom_call.1} parent=59 // pred_region
          %438 = dma.done [#allocation13], 512
        $region76: #{tpu_custom_call.1} parent=59 // pred_fallthru
          _
        %s439 = sand.u32 %s49, 1
        %s440 = scalar_lea.sflag [#allocation8], %s439
        %s441 = sand.u32 %s49, 1
        %s442 = smul.addr %s441, 8
        %s443 = scalar_lea.vmem [#allocation7], %s442
        %p444 = pneg %p62
        %p445 = pneg %p59
        %s446 = sand.u32 %s29, 1
        %s447 = scalar_lea.sflag [#allocation10], %s446
        %s448 = sand.u32 %s75, 1
        %s449 = smul.addr %s448, 24
        %s450 = scalar_lea.vmem [#allocation9], %s449
        %p451 = pneg %p88
        %p452 = pneg %p85
        %s453 = sand.u32 %s29, 1
        %s454 = scalar_lea.sflag [#allocation10], %s453
        %s455 = sand.u32 %s103, 1
        %s456 = smul.addr %s455, 32
        %s457 = scalar_lea.vmem [#allocation11], %s456
        %p458 = pneg %p116
        %p459 = pneg %p113
        %p460 = pneg %p137
        %p461 = pneg %p134
        %p462 = pneg %p158
        %p463 = pneg %p155
        %p464 = pneg %p179
        %p465 = pneg %p176
        %p466 = pneg %p200
        %p467 = pneg %p197
        %p468 = pneg %p221
        %p469 = pneg %p218
        %p470 = pneg %p242
        %p471 = pneg %p239
        %p472 = pneg %p263
        %p473 = pneg %p260
        %p474 = pneg %p289
        %p475 = pneg %p286
        %p476 = scmp.lt.s32.totalorder %s33, 1
        %s477 = scalar_select %p476, %s33, 1
        %s478 = smul.addr %s477, 4
        %s479 = scalar_lea.vmem %s10, %s478
        %s480 = smul.u32 4, %s34
        %p481 = scmp.lt.s32.totalorder %s33, 1
        %s482 = scalar_select %p481, %s33, 1
        %s483 = smul.addr %s482, 4
        %s484 = scalar_lea.vmem %s10, %s483
        %p486 = scmp.eq.s32.totalorder %s34, 0
        // Predicated region
        $region77: #{tpu_custom_call.1} parent=59 // pred_check
          %p487 = pneg %p486
        $region78: #{tpu_custom_call.1} parent=59 // pred_check_branch
          %489 = sbr.rel (%p487) target = $region80
        $region79: #{tpu_custom_call.1} parent=59 // pred_region
          %v490 = vld [vmem:[%s412] sm:$0xff]
          %v491 = vld [vmem:[%s3] sm:$0xff]
          %v492 = vld [vmem:[%s3 + $0x8] sm:$0xff]
          %v493 = vld [vmem:[%s3 + $0x10] sm:$0xff]
          %v494 = vld [vmem:[%s3 + $0x18] sm:$0xff]
          %v495 = vld [vmem:[%s4] sm:$0x1]
          %v497 = vlaneseq
          %v498 = vshrl.u32 %v497, 7
          %v499 = vsub.s32 0, %v498
          %v500 = vrot.slane %v495, %v499
          %vm502 = vcmask 261120
          %v504 = vsel %vm502, %v490, 0
          %506 = vmatprep.subr.mxu0 0.0
          %507 = vmatpush1.msra.mxu0 0.0
          %508 = vmatprep.subr.mxu0 0.0
          %509 = vmatpush1.msra.mxu0 0.0
          %510 = vmatprep.subr.mxu0 0.0
          %511 = vmatpush1.msra.mxu0 0.0
          %512 = vmatprep.subr.mxu0 0.0
          %513 = vmatpush1.msra.mxu0 0.0
          %514 = vmatprep.subr.mxu0 0.0
          %515 = vmatpush1.msra.mxu0 0.0
          %516 = vmatprep.subr.mxu0 0.0
          %517 = vmatpush1.msra.mxu0 0.0
          %518 = vmatprep.subr.mxu0 0.0
          %519 = vmatpush1.msra.mxu0 0.0
          %520 = vmatprep.subr.mxu0 0.0
          %521 = vmatpush1.msra.mxu0 0.0
          %522 = vmatprep.subr.mxu0 0.0
          %523 = vmatpush1.msra.mxu0 0.0
          %524 = vmatprep.subr.mxu0 0.0
          %525 = vmatpush1.msra.mxu0 0.0
          %526 = vmatprep.subr.mxu0 0.0
          %527 = vmatpush1.msra.mxu0 0.0
          %528 = vmatprep.subr.mxu0 0.0
          %529 = vmatpush1.msra.mxu0 0.0
          %530 = vmatprep.subr.mxu0 0.0
          %531 = vmatpush1.msra.mxu0 %v494
          %532 = vmatprep.subr.mxu0 0.0
          %533 = vmatpush1.msra.mxu0 %v493
          %534 = vmatprep.subr.mxu0 0.0
          %535 = vmatpush1.msra.mxu0 %v492
          %536 = vmatprep.subr.mxu0 0.0
          %537 = vmatpush1.msra.mxu0 %v491
          %538 = vmatprep.subr.mxu0 0.0
          %539 = vmatpush2.msra.mxu0 0.0
          %540 = vmatprep.subr.mxu0 0.0
          %541 = vmatpush2.msra.mxu0 0.0
          %542 = vmatprep.subr.mxu0 0.0
          %543 = vmatpush2.msra.mxu0 0.0
          %544 = vmatprep.subr.mxu0 0.0
          %545 = vmatpush2.msra.mxu0 0.0
          %546 = vmatprep.subr.mxu0 0.0
          %547 = vmatpush2.msra.mxu0 0.0
          %548 = vmatprep.subr.mxu0 0.0
          %549 = vmatpush2.msra.mxu0 0.0
          %550 = vmatprep.subr.mxu0 0.0
          %551 = vmatpush2.msra.mxu0 0.0
          %552 = vmatprep.subr.mxu0 0.0
          %553 = vmatpush2.msra.mxu0 0.0
          %554 = vmatprep.subr.mxu0 0.0
          %555 = vmatpush2.msra.mxu0 0.0
          %556 = vmatprep.subr.mxu0 0.0
          %557 = vmatpush2.msra.mxu0 0.0
          %558 = vmatprep.subr.mxu0 0.0
          %559 = vmatpush2.msra.mxu0 0.0
          %560 = vmatprep.subr.mxu0 0.0
          %561 = vmatpush2.msra.mxu0 0.0
          %562 = vmatprep.subr.mxu0 0.0
          %563 = vmatpush2.msra.mxu0 0.0
          %564 = vmatprep.subr.mxu0 0.0
          %565 = vmatpush2.msra.mxu0 0.0
          %566 = vmatprep.subr.mxu0 0.0
          %567 = vmatpush2.msra.mxu0 0.0
          %568 = vmatprep.subr.mxu0 0.0
          %569 = vmatpush2.msra.mxu0 0.0
          %570 = vmatprep.mubr.f32.mxu0 0.0
          %571 = vmatmul.mubr.f32.gmra.mxu0 %v504
          %v572 = vpop.f32.mrf.mxu0
          %v573 = vadd.f32 %v500, %v572
          %v574 = vpop.f32.mrf.mxu0
          %575 = vdwg.mxu0
          %576 = vxpose.xlu0.b32.start [1/16] %v573, 128
          %577 = vxpose.xlu0.b32.cont [2/16] 0.0, 128
          %578 = vxpose.xlu0.b32.cont [3/16] 0.0, 128
          %579 = vxpose.xlu0.b32.cont [4/16] 0.0, 128
          %580 = vxpose.xlu0.b32.cont [5/16] 0.0, 128
          %581 = vxpose.xlu0.b32.cont [6/16] 0.0, 128
          %582 = vxpose.xlu0.b32.cont [7/16] 0.0, 128
          %583 = vxpose.xlu0.b32.cont [8/16] 0.0, 128
          %584 = vxpose.xlu0.b32.cont [9/16] 0.0, 128
          %585 = vxpose.xlu0.b32.cont [10/16] 0.0, 128
          %586 = vxpose.xlu0.b32.cont [11/16] 0.0, 128
          %587 = vxpose.xlu0.b32.cont [12/16] 0.0, 128
          %588 = vxpose.xlu0.b32.cont [13/16] 0.0, 128
          %589 = vxpose.xlu0.b32.cont [14/16] 0.0, 128
          %590 = vxpose.xlu0.b32.cont [15/16] 0.0, 128
          %591 = vxpose.xlu0.b32.end [16/16] 0.0, 128
          %v592 = vpop.trf.xlu0
          %v593 = vpop.trf.xlu0
          %v594 = vpop.trf.xlu0
          %v595 = vpop.trf.xlu0
          %v596 = vpop.trf.xlu0
          %v597 = vpop.trf.xlu0
          %v598 = vpop.trf.xlu0
          %v599 = vpop.trf.xlu0
          %v600 = vpop.trf.xlu0
          %v601 = vpop.trf.xlu0
          %v602 = vpop.trf.xlu0
          %v603 = vpop.trf.xlu0
          %v604 = vpop.trf.xlu0
          %v605 = vpop.trf.xlu0
          %v606 = vpop.trf.xlu0
          %v607 = vpop.trf.xlu0
          %vm608 = vcmask 64512
          %609 = vst.msk [vmem:[#allocation2] sm:$0xff] %vm608, %v592
          %610 = vst.msk [vmem:[#allocation2 + $0x8] sm:$0xff] %vm608, %v593
          %611 = vst.msk [vmem:[#allocation2 + $0x10] sm:$0xff] %vm608, %v594
          %612 = vst.msk [vmem:[#allocation2 + $0x18] sm:$0xff] %vm608, %v595
          %v613 = vld [vmem:[#allocation12] sm:$0xff]
          %v614 = vld [vmem:[#allocation12 + $0x8] sm:$0xff]
          %v615 = vld [vmem:[#allocation12 + $0x10] sm:$0xff]
          %v616 = vld [vmem:[#allocation12 + $0x18] sm:$0xff]
          %v617 = vld [vmem:[%s6] sm:$0x1]
          %v619 = vlaneseq
          %v620 = vshrl.u32 %v619, 7
          %v621 = vsub.s32 0, %v620
          %v622 = vrot.slane %v617, %v621
          %624 = vmatprep.subr.mxu0 0.0
          %625 = vmatpush1.msra.mxu0 0.0
          %626 = vmatprep.subr.mxu0 0.0
          %627 = vmatpush1.msra.mxu0 0.0
          %628 = vmatprep.subr.mxu0 0.0
          %629 = vmatpush1.msra.mxu0 0.0
          %630 = vmatprep.subr.mxu0 0.0
          %631 = vmatpush1.msra.mxu0 0.0
          %632 = vmatprep.subr.mxu0 0.0
          %633 = vmatpush1.msra.mxu0 0.0
          %634 = vmatprep.subr.mxu0 0.0
          %635 = vmatpush1.msra.mxu0 0.0
          %636 = vmatprep.subr.mxu0 0.0
          %637 = vmatpush1.msra.mxu0 0.0
          %638 = vmatprep.subr.mxu0 0.0
          %639 = vmatpush1.msra.mxu0 0.0
          %640 = vmatprep.subr.mxu0 0.0
          %641 = vmatpush1.msra.mxu0 0.0
          %642 = vmatprep.subr.mxu0 0.0
          %643 = vmatpush1.msra.mxu0 0.0
          %644 = vmatprep.subr.mxu0 0.0
          %645 = vmatpush1.msra.mxu0 0.0
          %646 = vmatprep.subr.mxu0 0.0
          %647 = vmatpush1.msra.mxu0 0.0
          %648 = vmatprep.subr.mxu0 0.0
          %649 = vmatpush1.msra.mxu0 %v616
          %650 = vmatprep.subr.mxu0 0.0
          %651 = vmatpush1.msra.mxu0 %v615
          %652 = vmatprep.subr.mxu0 0.0
          %653 = vmatpush1.msra.mxu0 %v614
          %654 = vmatprep.subr.mxu0 0.0
          %655 = vmatpush1.msra.mxu0 %v613
          %656 = vmatprep.subr.mxu0 0.0
          %657 = vmatpush2.msra.mxu0 0.0
          %658 = vmatprep.subr.mxu0 0.0
          %659 = vmatpush2.msra.mxu0 0.0
          %660 = vmatprep.subr.mxu0 0.0
          %661 = vmatpush2.msra.mxu0 0.0
          %662 = vmatprep.subr.mxu0 0.0
          %663 = vmatpush2.msra.mxu0 0.0
          %664 = vmatprep.subr.mxu0 0.0
          %665 = vmatpush2.msra.mxu0 0.0
          %666 = vmatprep.subr.mxu0 0.0
          %667 = vmatpush2.msra.mxu0 0.0
          %668 = vmatprep.subr.mxu0 0.0
          %669 = vmatpush2.msra.mxu0 0.0
          %670 = vmatprep.subr.mxu0 0.0
          %671 = vmatpush2.msra.mxu0 0.0
          %672 = vmatprep.subr.mxu0 0.0
          %673 = vmatpush2.msra.mxu0 0.0
          %674 = vmatprep.subr.mxu0 0.0
          %675 = vmatpush2.msra.mxu0 0.0
          %676 = vmatprep.subr.mxu0 0.0
          %677 = vmatpush2.msra.mxu0 0.0
          %678 = vmatprep.subr.mxu0 0.0
          %679 = vmatpush2.msra.mxu0 0.0
          %680 = vmatprep.subr.mxu0 0.0
          %681 = vmatpush2.msra.mxu0 0.0
          %682 = vmatprep.subr.mxu0 0.0
          %683 = vmatpush2.msra.mxu0 0.0
          %684 = vmatprep.subr.mxu0 0.0
          %685 = vmatpush2.msra.mxu0 0.0
          %686 = vmatprep.subr.mxu0 0.0
          %687 = vmatpush2.msra.mxu0 0.0
          %688 = vmatprep.mubr.f32.mxu0 0.0
          %689 = vmatmul.mubr.f32.gmra.mxu0 %v504
          %v690 = vpop.f32.mrf.mxu0
          %v691 = vadd.f32 %v622, %v690
          %v692 = vpop.f32.mrf.mxu0
          %693 = vdwg.mxu0
          %694 = vxpose.xlu0.b32.start [1/16] %v691, 128
          %695 = vxpose.xlu0.b32.cont [2/16] 0.0, 128
          %696 = vxpose.xlu0.b32.cont [3/16] 0.0, 128
          %697 = vxpose.xlu0.b32.cont [4/16] 0.0, 128
          %698 = vxpose.xlu0.b32.cont [5/16] 0.0, 128
          %699 = vxpose.xlu0.b32.cont [6/16] 0.0, 128
          %700 = vxpose.xlu0.b32.cont [7/16] 0.0, 128
          %701 = vxpose.xlu0.b32.cont [8/16] 0.0, 128
          %702 = vxpose.xlu0.b32.cont [9/16] 0.0, 128
          %703 = vxpose.xlu0.b32.cont [10/16] 0.0, 128
          %704 = vxpose.xlu0.b32.cont [11/16] 0.0, 128
          %705 = vxpose.xlu0.b32.cont [12/16] 0.0, 128
          %706 = vxpose.xlu0.b32.cont [13/16] 0.0, 128
          %707 = vxpose.xlu0.b32.cont [14/16] 0.0, 128
          %708 = vxpose.xlu0.b32.cont [15/16] 0.0, 128
          %709 = vxpose.xlu0.b32.end [16/16] 0.0, 128
          %v710 = vpop.trf.xlu0
          %v711 = vpop.trf.xlu0
          %v712 = vpop.trf.xlu0
          %v713 = vpop.trf.xlu0
          %v714 = vpop.trf.xlu0
          %v715 = vpop.trf.xlu0
          %v716 = vpop.trf.xlu0
          %v717 = vpop.trf.xlu0
          %v718 = vpop.trf.xlu0
          %v719 = vpop.trf.xlu0
          %v720 = vpop.trf.xlu0
          %v721 = vpop.trf.xlu0
          %v722 = vpop.trf.xlu0
          %v723 = vpop.trf.xlu0
          %v724 = vpop.trf.xlu0
          %v725 = vpop.trf.xlu0
          %726 = vst.msk [vmem:[#allocation3] sm:$0xff] %vm608, %v710
          %727 = vst.msk [vmem:[#allocation3 + $0x8] sm:$0xff] %vm608, %v711
          %728 = vst.msk [vmem:[#allocation3 + $0x10] sm:$0xff] %vm608, %v712
          %729 = vst.msk [vmem:[#allocation3 + $0x18] sm:$0xff] %vm608, %v713
          %v730 = vld [vmem:[%s7] sm:$0xff]
          %v731 = vld [vmem:[%s7 + $0x8] sm:$0xff]
          %v732 = vld [vmem:[%s7 + $0x10] sm:$0xff]
          %v733 = vld [vmem:[%s7 + $0x18] sm:$0xff]
          %v734 = vld [vmem:[%s8] sm:$0x1]
          %v736 = vlaneseq
          %v737 = vshrl.u32 %v736, 7
          %v738 = vsub.s32 0, %v737
          %v739 = vrot.slane %v734, %v738
          %741 = vmatprep.subr.mxu0 0.0
          %742 = vmatpush1.msra.mxu0 0.0
          %743 = vmatprep.subr.mxu0 0.0
          %744 = vmatpush1.msra.mxu0 0.0
          %745 = vmatprep.subr.mxu0 0.0
          %746 = vmatpush1.msra.mxu0 0.0
          %747 = vmatprep.subr.mxu0 0.0
          %748 = vmatpush1.msra.mxu0 0.0
          %749 = vmatprep.subr.mxu0 0.0
          %750 = vmatpush1.msra.mxu0 0.0
          %751 = vmatprep.subr.mxu0 0.0
          %752 = vmatpush1.msra.mxu0 0.0
          %753 = vmatprep.subr.mxu0 0.0
          %754 = vmatpush1.msra.mxu0 0.0
          %755 = vmatprep.subr.mxu0 0.0
          %756 = vmatpush1.msra.mxu0 0.0
          %757 = vmatprep.subr.mxu0 0.0
          %758 = vmatpush1.msra.mxu0 0.0
          %759 = vmatprep.subr.mxu0 0.0
          %760 = vmatpush1.msra.mxu0 0.0
          %761 = vmatprep.subr.mxu0 0.0
          %762 = vmatpush1.msra.mxu0 0.0
          %763 = vmatprep.subr.mxu0 0.0
          %764 = vmatpush1.msra.mxu0 0.0
          %765 = vmatprep.subr.mxu0 0.0
          %766 = vmatpush1.msra.mxu0 %v733
          %767 = vmatprep.subr.mxu0 0.0
          %768 = vmatpush1.msra.mxu0 %v732
          %769 = vmatprep.subr.mxu0 0.0
          %770 = vmatpush1.msra.mxu0 %v731
          %771 = vmatprep.subr.mxu0 0.0
          %772 = vmatpush1.msra.mxu0 %v730
          %773 = vmatprep.subr.mxu0 0.0
          %774 = vmatpush2.msra.mxu0 0.0
          %775 = vmatprep.subr.mxu0 0.0
          %776 = vmatpush2.msra.mxu0 0.0
          %777 = vmatprep.subr.mxu0 0.0
          %778 = vmatpush2.msra.mxu0 0.0
          %779 = vmatprep.subr.mxu0 0.0
          %780 = vmatpush2.msra.mxu0 0.0
          %781 = vmatprep.subr.mxu0 0.0
          %782 = vmatpush2.msra.mxu0 0.0
          %783 = vmatprep.subr.mxu0 0.0
          %784 = vmatpush2.msra.mxu0 0.0
          %785 = vmatprep.subr.mxu0 0.0
          %786 = vmatpush2.msra.mxu0 0.0
          %787 = vmatprep.subr.mxu0 0.0
          %788 = vmatpush2.msra.mxu0 0.0
          %789 = vmatprep.subr.mxu0 0.0
          %790 = vmatpush2.msra.mxu0 0.0
          %791 = vmatprep.subr.mxu0 0.0
          %792 = vmatpush2.msra.mxu0 0.0
          %793 = vmatprep.subr.mxu0 0.0
          %794 = vmatpush2.msra.mxu0 0.0
          %795 = vmatprep.subr.mxu0 0.0
          %796 = vmatpush2.msra.mxu0 0.0
          %797 = vmatprep.subr.mxu0 0.0
          %798 = vmatpush2.msra.mxu0 0.0
          %799 = vmatprep.subr.mxu0 0.0
          %800 = vmatpush2.msra.mxu0 0.0
          %801 = vmatprep.subr.mxu0 0.0
          %802 = vmatpush2.msra.mxu0 0.0
          %803 = vmatprep.subr.mxu0 0.0
          %804 = vmatpush2.msra.mxu0 0.0
          %805 = vmatprep.mubr.f32.mxu0 0.0
          %806 = vmatmul.mubr.f32.gmra.mxu0 %v504
          %v807 = vpop.f32.mrf.mxu0
          %v808 = vadd.f32 %v739, %v807
          %v809 = vpop.f32.mrf.mxu0
          %810 = vdwg.mxu0
          %811 = vxpose.xlu0.b32.start [1/16] %v808, 128
          %812 = vxpose.xlu0.b32.cont [2/16] 0.0, 128
          %813 = vxpose.xlu0.b32.cont [3/16] 0.0, 128
          %814 = vxpose.xlu0.b32.cont [4/16] 0.0, 128
          %815 = vxpose.xlu0.b32.cont [5/16] 0.0, 128
          %816 = vxpose.xlu0.b32.cont [6/16] 0.0, 128
          %817 = vxpose.xlu0.b32.cont [7/16] 0.0, 128
          %818 = vxpose.xlu0.b32.cont [8/16] 0.0, 128
          %819 = vxpose.xlu0.b32.cont [9/16] 0.0, 128
          %820 = vxpose.xlu0.b32.cont [10/16] 0.0, 128
          %821 = vxpose.xlu0.b32.cont [11/16] 0.0, 128
          %822 = vxpose.xlu0.b32.cont [12/16] 0.0, 128
          %823 = vxpose.xlu0.b32.cont [13/16] 0.0, 128
          %824 = vxpose.xlu0.b32.cont [14/16] 0.0, 128
          %825 = vxpose.xlu0.b32.cont [15/16] 0.0, 128
          %826 = vxpose.xlu0.b32.end [16/16] 0.0, 128
          %v827 = vpop.trf.xlu0
          %v828 = vpop.trf.xlu0
          %v829 = vpop.trf.xlu0
          %v830 = vpop.trf.xlu0
          %v831 = vpop.trf.xlu0
          %v832 = vpop.trf.xlu0
          %v833 = vpop.trf.xlu0
          %v834 = vpop.trf.xlu0
          %v835 = vpop.trf.xlu0
          %v836 = vpop.trf.xlu0
          %v837 = vpop.trf.xlu0
          %v838 = vpop.trf.xlu0
          %v839 = vpop.trf.xlu0
          %v840 = vpop.trf.xlu0
          %v841 = vpop.trf.xlu0
          %v842 = vpop.trf.xlu0
          %vm843 = vcmask 60416
          %844 = vst.msk [vmem:[#allocation4] sm:$0xf] %vm843, %v827
          %vm845 = vcmask 59392
          %846 = vst.msk [vmem:[#allocation5] sm:$0x7] %vm845, 0.0
        $region80: #{tpu_custom_call.1} parent=59 // pred_fallthru
          _
        %v847 = vld [vmem:[%s421] sm:$0xff]
        %v848 = vld [vmem:[%s421 + $0x8] sm:$0xff]
        %v849 = vld [vmem:[%s421 + $0x10] sm:$0xff]
        %s850 = smul.u32 %s34, 4
        %s851 = smul.u32 %s34, 32
        %s852 = scalar_lea.vmem [#allocation2], %s851
        %v853 = vld [vmem:[%s852] sm:$0xff]
        %v854 = vpack.c.bf16 %v853, %v853
        %s855 = scalar_lea.vmem [#allocation3], %s851
        %v856 = vld [vmem:[%s855] sm:$0xff]
        %v857 = vpack.c.bf16 %v856, %v856
        %v858 = vld [vmem:[%s430] sm:$0xff]
        %859 = vxpose.xlu0.c.b16.start [1/8] %v854, 128
        %860 = vxpose.xlu0.c.b16.cont [2/8] 0, 128
        %861 = vxpose.xlu0.c.b16.cont [3/8] 0, 128
        %862 = vxpose.xlu0.c.b16.cont [4/8] 0, 128
        %863 = vxpose.xlu0.c.b16.cont [5/8] 0, 128
        %864 = vxpose.xlu0.c.b16.cont [6/8] 0, 128
        %865 = vxpose.xlu0.c.b16.cont [7/8] 0, 128
        %866 = vxpose.xlu0.c.b16.end [8/8] 0, 128
        %v867 = vpop.trf.xlu0
        %v868 = vpop.trf.xlu0
        %v869 = vpop.trf.xlu0
        %v870 = vpop.trf.xlu0
        %v871 = vpop.trf.xlu0
        %v872 = vpop.trf.xlu0
        %v873 = vpop.trf.xlu0
        %v874 = vpop.trf.xlu0
        %vm875 = vcmask 64512
        %v877 = vsel %vm875, %v867, 0
        %vm879 = vcmask 1043456
        %v881 = vsel %vm879, %v857, 0
        %883 = vmatprep.subr.bf16.mxu0 0
        %884 = vmatpush1.bf16.msra.mxu0 0
        %885 = vmatprep.subr.bf16.mxu0 0
        %886 = vmatpush1.bf16.msra.mxu0 0
        %887 = vmatprep.subr.bf16.mxu0 0
        %888 = vmatpush1.bf16.msra.mxu0 0
        %889 = vmatprep.subr.bf16.mxu0 0
        %890 = vmatpush1.bf16.msra.mxu0 0
        %891 = vmatprep.subr.bf16.mxu0 0
        %892 = vmatpush1.bf16.msra.mxu0 0
        %893 = vmatprep.subr.bf16.mxu0 0
        %894 = vmatpush1.bf16.msra.mxu0 0
        %895 = vmatprep.subr.bf16.mxu0 0
        %896 = vmatpush1.bf16.msra.mxu0 0
        %897 = vmatprep.subr.bf16.mxu0 0
        %898 = vmatpush1.bf16.msra.mxu0 %v881
        %899 = vmatprep.subr.bf16.mxu0 0
        %900 = vmatpush2.bf16.msra.mxu0 0
        %901 = vmatprep.subr.bf16.mxu0 0
        %902 = vmatpush2.bf16.msra.mxu0 0
        %903 = vmatprep.subr.bf16.mxu0 0
        %904 = vmatpush2.bf16.msra.mxu0 0
        %905 = vmatprep.subr.bf16.mxu0 0
        %906 = vmatpush2.bf16.msra.mxu0 0
        %907 = vmatprep.subr.bf16.mxu0 0
        %908 = vmatpush2.bf16.msra.mxu0 0
        %909 = vmatprep.subr.bf16.mxu0 0
        %910 = vmatpush2.bf16.msra.mxu0 0
        %911 = vmatprep.subr.bf16.mxu0 0
        %912 = vmatpush2.bf16.msra.mxu0 0
        %913 = vmatprep.subr.bf16.mxu0 0
        %914 = vmatpush2.bf16.msra.mxu0 0
        %915 = vmatprep.mubr.bf16.mxu0 0
        %916 = vmatmul.mubr.bf16.gmra.mxu0 %v877
        %v917 = vpop.f32.mrf.mxu0
        %v918 = vadd.f32 %v858, %v917
        %v919 = vpop.f32.mrf.mxu0
        %v920 = vpop.f32.mrf.mxu0
        %v921 = vpop.f32.mrf.mxu0
        %922 = vdwg.mxu0
        %v923 = vsel %vm875, %v918, -inf
        %924 = vmax.xlane.f32.xlu0 %v923
        %v925 = vpop.xlane.xlu0 %924
        %v926 = vsub.f32 %v918, %v925
        %v927 = vmul.f32 %v926, 1.442695
        %v928 = vpow.pop %v927
        %v929 = vsel %vm875, %v928, 0.0
        %930 = vadd.xlane.f32.xlu0 %v929
        %v931 = vpop.xlane.xlu0 %930
        %v932 = vrcp.pop %v931
        %v933 = vmul.f32 %v928, %v932
        %s934 = scalar_lea.vmem [#allocation4], %s850
        %v935 = vld [vmem:[%s934] sm:$0x1]
        %v936 = vlaneseq
        %v937 = vshrl.u32 %v936, 7
        %v938 = vsub.s32 0, %v937
        %v939 = vrot.slane %v935, %v938
        %v940 = vmul.f32 %v933, %v939
        %v941 = vld [vmem:[#allocation5] sm:$0x7]
        %v942 = vmul.f32 %v847, %v940
        %v943 = vmul.f32 %v848, %v940
        %v944 = vmul.f32 %v849, %v940
        %v945 = vsel %vm875, %v942, 0.0
        %946 = vadd.xlane.f32.xlu0 %v945
        %v947 = vpop.xlane.xlu0 %946
        %v948 = vsel %vm875, %v943, 0.0
        %949 = vadd.xlane.f32.xlu0 %v948
        %v950 = vpop.xlane.xlu0 %949
        %v951 = vsel %vm875, %v944, 0.0
        %952 = vadd.xlane.f32.xlu0 %v951
        %v953 = vpop.xlane.xlu0 %952
        %v957 = vlaneseq
        %v958 = vand.u32 %v957, 127
        %v959 = vlaneseq
        %v960 = vshrl.u32 %v959, 7
        %v961 = vsub.s32 %v958, %v960
        %v962 = vrot.slane %v947, %v961
        %v963 = vlaneseq
        %v964 = vshrl.u32 %v963, 7
        %v965 = vsub.s32 %v958, %v964
        %v966 = vrot.slane %v950, %v965
        %v967 = vlaneseq
        %v968 = vshrl.u32 %v967, 7
        %v969 = vsub.s32 %v958, %v968
        %v970 = vrot.slane %v953, %v969
        %vm971 = vcmask 1041409
        %v972 = vsel %vm971, %v966, %v962
        %vm973 = vcmask 1042434
        %v974 = vsel %vm973, %v970, %v972
        %v976 = vadd.f32 %v941, %v974
        %vm977 = vcmask 59392
        %978 = vst.msk [vmem:[#allocation5] sm:$0x7] %vm977, %v976
        %s979 = sadd.s32 %s850, 1
        %s980 = smul.u32 %s979, 8
        %s981 = scalar_lea.vmem [#allocation2], %s980
        %v982 = vld [vmem:[%s981] sm:$0xff]
        %v983 = vpack.c.bf16 %v982, %v982
        %s984 = scalar_lea.vmem [#allocation3], %s980
        %v985 = vld [vmem:[%s984] sm:$0xff]
        %v986 = vpack.c.bf16 %v985, %v985
        %s987 = scalar_lea.vmem %s430, 8 [#allocation11]
        %v988 = vld [vmem:[%s987] sm:$0xff]
        %989 = vxpose.xlu0.c.b16.start [1/8] %v983, 128
        %990 = vxpose.xlu0.c.b16.cont [2/8] 0, 128
        %991 = vxpose.xlu0.c.b16.cont [3/8] 0, 128
        %992 = vxpose.xlu0.c.b16.cont [4/8] 0, 128
        %993 = vxpose.xlu0.c.b16.cont [5/8] 0, 128
        %994 = vxpose.xlu0.c.b16.cont [6/8] 0, 128
        %995 = vxpose.xlu0.c.b16.cont [7/8] 0, 128
        %996 = vxpose.xlu0.c.b16.end [8/8] 0, 128
        %v997 = vpop.trf.xlu0
        %v998 = vpop.trf.xlu0
        %v999 = vpop.trf.xlu0
        %v1000 = vpop.trf.xlu0
        %v1001 = vpop.trf.xlu0
        %v1002 = vpop.trf.xlu0
        %v1003 = vpop.trf.xlu0
        %v1004 = vpop.trf.xlu0
        %v1006 = vsel %vm875, %v997, 0
        %v1009 = vsel %vm879, %v986, 0
        %1011 = vmatprep.subr.bf16.mxu0 0
        %1012 = vmatpush1.bf16.msra.mxu0 0
        %1013 = vmatprep.subr.bf16.mxu0 0
        %1014 = vmatpush1.bf16.msra.mxu0 0
        %1015 = vmatprep.subr.bf16.mxu0 0
        %1016 = vmatpush1.bf16.msra.mxu0 0
        %1017 = vmatprep.subr.bf16.mxu0 0
        %1018 = vmatpush1.bf16.msra.mxu0 0
        %1019 = vmatprep.subr.bf16.mxu0 0
        %1020 = vmatpush1.bf16.msra.mxu0 0
        %1021 = vmatprep.subr.bf16.mxu0 0
        %1022 = vmatpush1.bf16.msra.mxu0 0
        %1023 = vmatprep.subr.bf16.mxu0 0
        %1024 = vmatpush1.bf16.msra.mxu0 0
        %1025 = vmatprep.subr.bf16.mxu0 0
        %1026 = vmatpush1.bf16.msra.mxu0 %v1009
        %1027 = vmatprep.subr.bf16.mxu0 0
        %1028 = vmatpush2.bf16.msra.mxu0 0
        %1029 = vmatprep.subr.bf16.mxu0 0
        %1030 = vmatpush2.bf16.msra.mxu0 0
        %1031 = vmatprep.subr.bf16.mxu0 0
        %1032 = vmatpush2.bf16.msra.mxu0 0
        %1033 = vmatprep.subr.bf16.mxu0 0
        %1034 = vmatpush2.bf16.msra.mxu0 0
        %1035 = vmatprep.subr.bf16.mxu0 0
        %1036 = vmatpush2.bf16.msra.mxu0 0
        %1037 = vmatprep.subr.bf16.mxu0 0
        %1038 = vmatpush2.bf16.msra.mxu0 0
        %1039 = vmatprep.subr.bf16.mxu0 0
        %1040 = vmatpush2.bf16.msra.mxu0 0
        %1041 = vmatprep.subr.bf16.mxu0 0
        %1042 = vmatpush2.bf16.msra.mxu0 0
        %1043 = vmatprep.mubr.bf16.mxu0 0
        %1044 = vmatmul.mubr.bf16.gmra.mxu0 %v1006
        %v1045 = vpop.f32.mrf.mxu0
        %v1046 = vadd.f32 %v988, %v1045
        %v1047 = vpop.f32.mrf.mxu0
        %v1048 = vpop.f32.mrf.mxu0
        %v1049 = vpop.f32.mrf.mxu0
        %1050 = vdwg.mxu0
        %v1051 = vsel %vm875, %v1046, -inf
        %1052 = vmax.xlane.f32.xlu0 %v1051
        %v1053 = vpop.xlane.xlu0 %1052
        %v1054 = vsub.f32 %v1046, %v1053
        %v1055 = vmul.f32 %v1054, 1.442695
        %v1056 = vpow.pop %v1055
        %v1057 = vsel %vm875, %v1056, 0.0
        %1058 = vadd.xlane.f32.xlu0 %v1057
        %v1059 = vpop.xlane.xlu0 %1058
        %v1060 = vrcp.pop %v1059
        %v1061 = vmul.f32 %v1056, %v1060
        %s1062 = scalar_lea.vmem [#allocation4], %s979
        %v1063 = vld [vmem:[%s1062] sm:$0x1]
        %v1064 = vlaneseq
        %v1065 = vshrl.u32 %v1064, 7
        %v1066 = vsub.s32 0, %v1065
        %v1067 = vrot.slane %v1063, %v1066
        %v1068 = vmul.f32 %v1061, %v1067
        %v1069 = vld [vmem:[#allocation5] sm:$0x7]
        %v1070 = vmul.f32 %v847, %v1068
        %v1071 = vmul.f32 %v848, %v1068
        %v1072 = vmul.f32 %v849, %v1068
        %v1073 = vsel %vm875, %v1070, 0.0
        %1074 = vadd.xlane.f32.xlu0 %v1073
        %v1075 = vpop.xlane.xlu0 %1074
        %v1076 = vsel %vm875, %v1071, 0.0
        %1077 = vadd.xlane.f32.xlu0 %v1076
        %v1078 = vpop.xlane.xlu0 %1077
        %v1079 = vsel %vm875, %v1072, 0.0
        %1080 = vadd.xlane.f32.xlu0 %v1079
        %v1081 = vpop.xlane.xlu0 %1080
        %v1085 = vlaneseq
        %v1086 = vshrl.u32 %v1085, 7
        %v1087 = vsub.s32 %v958, %v1086
        %v1088 = vrot.slane %v1075, %v1087
        %v1089 = vlaneseq
        %v1090 = vshrl.u32 %v1089, 7
        %v1091 = vsub.s32 %v958, %v1090
        %v1092 = vrot.slane %v1078, %v1091
        %v1093 = vlaneseq
        %v1094 = vshrl.u32 %v1093, 7
        %v1095 = vsub.s32 %v958, %v1094
        %v1096 = vrot.slane %v1081, %v1095
        %v1097 = vsel %vm971, %v1092, %v1088
        %v1098 = vsel %vm973, %v1096, %v1097
        %v1100 = vadd.f32 %v1069, %v1098
        %1101 = vst.msk [vmem:[#allocation5] sm:$0x7] %vm977, %v1100
        %s1102 = sadd.s32 %s850, 2
        %s1103 = smul.u32 %s1102, 8
        %s1104 = scalar_lea.vmem [#allocation2], %s1103
        %v1105 = vld [vmem:[%s1104] sm:$0xff]
        %v1106 = vpack.c.bf16 %v1105, %v1105
        %s1107 = scalar_lea.vmem [#allocation3], %s1103
        %v1108 = vld [vmem:[%s1107] sm:$0xff]
        %v1109 = vpack.c.bf16 %v1108, %v1108
        %s1110 = scalar_lea.vmem %s430, 16 [#allocation11]
        %v1111 = vld [vmem:[%s1110] sm:$0xff]
        %1112 = vxpose.xlu0.c.b16.start [1/8] %v1106, 128
        %1113 = vxpose.xlu0.c.b16.cont [2/8] 0, 128
        %1114 = vxpose.xlu0.c.b16.cont [3/8] 0, 128
        %1115 = vxpose.xlu0.c.b16.cont [4/8] 0, 128
        %1116 = vxpose.xlu0.c.b16.cont [5/8] 0, 128
        %1117 = vxpose.xlu0.c.b16.cont [6/8] 0, 128
        %1118 = vxpose.xlu0.c.b16.cont [7/8] 0, 128
        %1119 = vxpose.xlu0.c.b16.end [8/8] 0, 128
        %v1120 = vpop.trf.xlu0
        %v1121 = vpop.trf.xlu0
        %v1122 = vpop.trf.xlu0
        %v1123 = vpop.trf.xlu0
        %v1124 = vpop.trf.xlu0
        %v1125 = vpop.trf.xlu0
        %v1126 = vpop.trf.xlu0
        %v1127 = vpop.trf.xlu0
        %v1129 = vsel %vm875, %v1120, 0
        %v1132 = vsel %vm879, %v1109, 0
        %1134 = vmatprep.subr.bf16.mxu0 0
        %1135 = vmatpush1.bf16.msra.mxu0 0
        %1136 = vmatprep.subr.bf16.mxu0 0
        %1137 = vmatpush1.bf16.msra.mxu0 0
        %1138 = vmatprep.subr.bf16.mxu0 0
        %1139 = vmatpush1.bf16.msra.mxu0 0
        %1140 = vmatprep.subr.bf16.mxu0 0
        %1141 = vmatpush1.bf16.msra.mxu0 0
        %1142 = vmatprep.subr.bf16.mxu0 0
        %1143 = vmatpush1.bf16.msra.mxu0 0
        %1144 = vmatprep.subr.bf16.mxu0 0
        %1145 = vmatpush1.bf16.msra.mxu0 0
        %1146 = vmatprep.subr.bf16.mxu0 0
        %1147 = vmatpush1.bf16.msra.mxu0 0
        %1148 = vmatprep.subr.bf16.mxu0 0
        %1149 = vmatpush1.bf16.msra.mxu0 %v1132
        %1150 = vmatprep.subr.bf16.mxu0 0
        %1151 = vmatpush2.bf16.msra.mxu0 0
        %1152 = vmatprep.subr.bf16.mxu0 0
        %1153 = vmatpush2.bf16.msra.mxu0 0
        %1154 = vmatprep.subr.bf16.mxu0 0
        %1155 = vmatpush2.bf16.msra.mxu0 0
        %1156 = vmatprep.subr.bf16.mxu0 0
        %1157 = vmatpush2.bf16.msra.mxu0 0
        %1158 = vmatprep.subr.bf16.mxu0 0
        %1159 = vmatpush2.bf16.msra.mxu0 0
        %1160 = vmatprep.subr.bf16.mxu0 0
        %1161 = vmatpush2.bf16.msra.mxu0 0
        %1162 = vmatprep.subr.bf16.mxu0 0
        %1163 = vmatpush2.bf16.msra.mxu0 0
        %1164 = vmatprep.subr.bf16.mxu0 0
        %1165 = vmatpush2.bf16.msra.mxu0 0
        %1166 = vmatprep.mubr.bf16.mxu0 0
        %1167 = vmatmul.mubr.bf16.gmra.mxu0 %v1129
        %v1168 = vpop.f32.mrf.mxu0
        %v1169 = vadd.f32 %v1111, %v1168
        %v1170 = vpop.f32.mrf.mxu0
        %v1171 = vpop.f32.mrf.mxu0
        %v1172 = vpop.f32.mrf.mxu0
        %1173 = vdwg.mxu0
        %v1174 = vsel %vm875, %v1169, -inf
        %1175 = vmax.xlane.f32.xlu0 %v1174
        %v1176 = vpop.xlane.xlu0 %1175
        %v1177 = vsub.f32 %v1169, %v1176
        %v1178 = vmul.f32 %v1177, 1.442695
        %v1179 = vpow.pop %v1178
        %v1180 = vsel %vm875, %v1179, 0.0
        %1181 = vadd.xlane.f32.xlu0 %v1180
        %v1182 = vpop.xlane.xlu0 %1181
        %v1183 = vrcp.pop %v1182
        %v1184 = vmul.f32 %v1179, %v1183
        %s1185 = scalar_lea.vmem [#allocation4], %s1102
        %v1186 = vld [vmem:[%s1185] sm:$0x1]
        %v1187 = vlaneseq
        %v1188 = vshrl.u32 %v1187, 7
        %v1189 = vsub.s32 0, %v1188
        %v1190 = vrot.slane %v1186, %v1189
        %v1191 = vmul.f32 %v1184, %v1190
        %v1192 = vld [vmem:[#allocation5] sm:$0x7]
        %v1193 = vmul.f32 %v847, %v1191
        %v1194 = vmul.f32 %v848, %v1191
        %v1195 = vmul.f32 %v849, %v1191
        %v1196 = vsel %vm875, %v1193, 0.0
        %1197 = vadd.xlane.f32.xlu0 %v1196
        %v1198 = vpop.xlane.xlu0 %1197
        %v1199 = vsel %vm875, %v1194, 0.0
        %1200 = vadd.xlane.f32.xlu0 %v1199
        %v1201 = vpop.xlane.xlu0 %1200
        %v1202 = vsel %vm875, %v1195, 0.0
        %1203 = vadd.xlane.f32.xlu0 %v1202
        %v1204 = vpop.xlane.xlu0 %1203
        %v1208 = vlaneseq
        %v1209 = vshrl.u32 %v1208, 7
        %v1210 = vsub.s32 %v958, %v1209
        %v1211 = vrot.slane %v1198, %v1210
        %v1212 = vlaneseq
        %v1213 = vshrl.u32 %v1212, 7
        %v1214 = vsub.s32 %v958, %v1213
        %v1215 = vrot.slane %v1201, %v1214
        %v1216 = vlaneseq
        %v1217 = vshrl.u32 %v1216, 7
        %v1218 = vsub.s32 %v958, %v1217
        %v1219 = vrot.slane %v1204, %v1218
        %v1220 = vsel %vm971, %v1215, %v1211
        %v1221 = vsel %vm973, %v1219, %v1220
        %v1223 = vadd.f32 %v1192, %v1221
        %1224 = vst.msk [vmem:[#allocation5] sm:$0x7] %vm977, %v1223
        %s1225 = sadd.s32 %s850, 3
        %s1226 = smul.u32 %s1225, 8
        %s1227 = scalar_lea.vmem [#allocation2], %s1226
        %v1228 = vld [vmem:[%s1227] sm:$0xff]
        %v1229 = vpack.c.bf16 %v1228, %v1228
        %s1230 = scalar_lea.vmem [#allocation3], %s1226
        %v1231 = vld [vmem:[%s1230] sm:$0xff]
        %v1232 = vpack.c.bf16 %v1231, %v1231
        %s1233 = scalar_lea.vmem %s430, 24 [#allocation11]
        %v1234 = vld [vmem:[%s1233] sm:$0xff]
        %1235 = vxpose.xlu0.c.b16.start [1/8] %v1229, 128
        %1236 = vxpose.xlu0.c.b16.cont [2/8] 0, 128
        %1237 = vxpose.xlu0.c.b16.cont [3/8] 0, 128
        %1238 = vxpose.xlu0.c.b16.cont [4/8] 0, 128
        %1239 = vxpose.xlu0.c.b16.cont [5/8] 0, 128
        %1240 = vxpose.xlu0.c.b16.cont [6/8] 0, 128
        %1241 = vxpose.xlu0.c.b16.cont [7/8] 0, 128
        %1242 = vxpose.xlu0.c.b16.end [8/8] 0, 128
        %v1243 = vpop.trf.xlu0
        %v1244 = vpop.trf.xlu0
        %v1245 = vpop.trf.xlu0
        %v1246 = vpop.trf.xlu0
        %v1247 = vpop.trf.xlu0
        %v1248 = vpop.trf.xlu0
        %v1249 = vpop.trf.xlu0
        %v1250 = vpop.trf.xlu0
        %v1252 = vsel %vm875, %v1243, 0
        %v1255 = vsel %vm879, %v1232, 0
        %1257 = vmatprep.subr.bf16.mxu0 0
        %1258 = vmatpush1.bf16.msra.mxu0 0
        %1259 = vmatprep.subr.bf16.mxu0 0
        %1260 = vmatpush1.bf16.msra.mxu0 0
        %1261 = vmatprep.subr.bf16.mxu0 0
        %1262 = vmatpush1.bf16.msra.mxu0 0
        %1263 = vmatprep.subr.bf16.mxu0 0
        %1264 = vmatpush1.bf16.msra.mxu0 0
        %1265 = vmatprep.subr.bf16.mxu0 0
        %1266 = vmatpush1.bf16.msra.mxu0 0
        %1267 = vmatprep.subr.bf16.mxu0 0
        %1268 = vmatpush1.bf16.msra.mxu0 0
        %1269 = vmatprep.subr.bf16.mxu0 0
        %1270 = vmatpush1.bf16.msra.mxu0 0
        %1271 = vmatprep.subr.bf16.mxu0 0
        %1272 = vmatpush1.bf16.msra.mxu0 %v1255
        %1273 = vmatprep.subr.bf16.mxu0 0
        %1274 = vmatpush2.bf16.msra.mxu0 0
        %1275 = vmatprep.subr.bf16.mxu0 0
        %1276 = vmatpush2.bf16.msra.mxu0 0
        %1277 = vmatprep.subr.bf16.mxu0 0
        %1278 = vmatpush2.bf16.msra.mxu0 0
        %1279 = vmatprep.subr.bf16.mxu0 0
        %1280 = vmatpush2.bf16.msra.mxu0 0
        %1281 = vmatprep.subr.bf16.mxu0 0
        %1282 = vmatpush2.bf16.msra.mxu0 0
        %1283 = vmatprep.subr.bf16.mxu0 0
        %1284 = vmatpush2.bf16.msra.mxu0 0
        %1285 = vmatprep.subr.bf16.mxu0 0
        %1286 = vmatpush2.bf16.msra.mxu0 0
        %1287 = vmatprep.subr.bf16.mxu0 0
        %1288 = vmatpush2.bf16.msra.mxu0 0
        %1289 = vmatprep.mubr.bf16.mxu0 0
        %1290 = vmatmul.mubr.bf16.gmra.mxu0 %v1252
        %v1291 = vpop.f32.mrf.mxu0
        %v1292 = vadd.f32 %v1234, %v1291
        %v1293 = vpop.f32.mrf.mxu0
        %v1294 = vpop.f32.mrf.mxu0
        %v1295 = vpop.f32.mrf.mxu0
        %1296 = vdwg.mxu0
        %v1297 = vsel %vm875, %v1292, -inf
        %1298 = vmax.xlane.f32.xlu0 %v1297
        %v1299 = vpop.xlane.xlu0 %1298
        %v1300 = vsub.f32 %v1292, %v1299
        %v1301 = vmul.f32 %v1300, 1.442695
        %v1302 = vpow.pop %v1301
        %v1303 = vsel %vm875, %v1302, 0.0
        %1304 = vadd.xlane.f32.xlu0 %v1303
        %v1305 = vpop.xlane.xlu0 %1304
        %v1306 = vrcp.pop %v1305
        %v1307 = vmul.f32 %v1302, %v1306
        %s1308 = scalar_lea.vmem [#allocation4], %s1225
        %v1309 = vld [vmem:[%s1308] sm:$0x1]
        %v1310 = vlaneseq
        %v1311 = vshrl.u32 %v1310, 7
        %v1312 = vsub.s32 0, %v1311
        %v1313 = vrot.slane %v1309, %v1312
        %v1314 = vmul.f32 %v1307, %v1313
        %v1315 = vld [vmem:[#allocation5] sm:$0x7]
        %v1316 = vmul.f32 %v847, %v1314
        %v1317 = vmul.f32 %v848, %v1314
        %v1318 = vmul.f32 %v849, %v1314
        %v1319 = vsel %vm875, %v1316, 0.0
        %1320 = vadd.xlane.f32.xlu0 %v1319
        %v1321 = vpop.xlane.xlu0 %1320
        %v1322 = vsel %vm875, %v1317, 0.0
        %1323 = vadd.xlane.f32.xlu0 %v1322
        %v1324 = vpop.xlane.xlu0 %1323
        %v1325 = vsel %vm875, %v1318, 0.0
        %1326 = vadd.xlane.f32.xlu0 %v1325
        %v1327 = vpop.xlane.xlu0 %1326
        %v1331 = vlaneseq
        %v1332 = vshrl.u32 %v1331, 7
        %v1333 = vsub.s32 %v958, %v1332
        %v1334 = vrot.slane %v1321, %v1333
        %v1335 = vlaneseq
        %v1336 = vshrl.u32 %v1335, 7
        %v1337 = vsub.s32 %v958, %v1336
        %v1338 = vrot.slane %v1324, %v1337
        %v1339 = vlaneseq
        %v1340 = vshrl.u32 %v1339, 7
        %v1341 = vsub.s32 %v958, %v1340
        %v1342 = vrot.slane %v1327, %v1341
        %v1343 = vsel %vm971, %v1338, %v1334
        %v1344 = vsel %vm973, %v1342, %v1343
        %v1346 = vadd.f32 %v1315, %v1344
        %1347 = vst.msk [vmem:[#allocation5] sm:$0x7] %vm977, %v1346
        // Predicated region
        $region81: #{tpu_custom_call.1} parent=59 // pred_check
          %p1348 = pneg %p486
        $region82: #{tpu_custom_call.1} parent=59 // pred_check_branch
          %1350 = sbr.rel (%p1348) target = $region84
        $region83: #{tpu_custom_call.1} parent=59 // pred_region
          %v1351 = vld [vmem:[#allocation5] sm:$0x7]
          %s1352 = sld [smem:[#allocation6]]
          %v1353 = vstv %s1352
          %v1354 = vadd.f32 %v1351, %v1353
          %1355 = vst.msk [vmem:[%s484] sm:$0x7] %vm977, %v1354
        $region84: #{tpu_custom_call.1} parent=59 // pred_fallthru
          _
        %p1356 = scmp.lt.s32.totalorder %s33, 1
        %s1357 = scalar_select %p1356, %s33, 1
        %s1358 = smul.addr %s1357, 4
        %s1359 = scalar_lea.vmem %s10, %s1358
        // Predicated region
        $region85: #{tpu_custom_call.1} parent=59 // pred_check
          %p1360 = pneg %p286
        $region86: #{tpu_custom_call.1} parent=59 // pred_check_branch
          %1362 = sbr.rel (%p1360) target = $region88
        $region87: #{tpu_custom_call.1} parent=59 // pred_region
          _
        $region88: #{tpu_custom_call.1} parent=59 // pred_fallthru
          _
      $region60: #{tpu_custom_call.1} parent=5 // pred_fallthru
        _
      %p1363 = scmp.le.s32.totalorder 2, %s24
      // Predicated region
      $region89: #{tpu_custom_call.1} parent=5 // pred_check
        %p1364 = pneg %p1363
      $region90: #{tpu_custom_call.1} parent=5 // pred_check_branch
        %1366 = sbr.rel (%p1364) target = $region92
      $region91: #{tpu_custom_call.1} parent=5 // pred_region
        %s1367 = ssub.s32 %s24, 2
        // Predicated region
        $region93: #{tpu_custom_call.1} parent=91 // pred_check
          %p1368 = pneg %p292
        $region94: #{tpu_custom_call.1} parent=91 // pred_check_branch
          %1370 = sbr.rel (%p1368) target = $region96
        $region95: #{tpu_custom_call.1} parent=91 // pred_region
          %p1371 = scmp.lt.s32.totalorder %s35, 1
          %s1372 = scalar_select %p1371, %s35, 1
          %s1373 = smul.addr %s1372, 4
          %s1374 = scalar_lea.vmem %s10, %s1373
        $region96: #{tpu_custom_call.1} parent=91 // pred_fallthru
          _
      $region92: #{tpu_custom_call.1} parent=5 // pred_fallthru
        _
    $region6: #{tpu_custom_call.1} parent=1 // loop_footer
      %s28 = sadd.s32 1, %s24
    $region7: #{tpu_custom_call.1} parent=1 // loop_footer_branch
      %23 = sbr.rel target = $region3
    $region8: #{tpu_custom_call.1} parent=1 // loop_exit
      _
    %1375 = vsyncpa [#allocation8], 1
    %s1376 = scalar_lea.sflag [#allocation8], 1
    %1377 = vsyncpa %s1376, 1
    %1378 = vsyncpa [#allocation10], 1
    %s1379 = scalar_lea.sflag [#allocation10], 1
    %1380 = vsyncpa %s1379, 1
    %1381 = vsyncpa [#allocation13], 1

</llo_original>
